<compile_context>
chip_gen: v7x
topology: tpu7x:2x2x1
jax: 0.10.0
libtpu: 0.0.40
codegen_flags: <defaults>
</compile_context>

<pallas_src>
import functools

import jax
import jax.numpy as jnp
from jax.experimental import pallas as pl
from jax.experimental.pallas import tpu as pltpu

EPS = 1e-5  # torch.nn.BatchNorm2d default


def _vmem_spec():
    # Whole-operand VMEM blocks (shapes here are tiny).
    return pl.BlockSpec(memory_space=pltpu.MemorySpace.VMEM)


# ----------------------------------------------------------------------------
# Fused Pallas kernels
# ----------------------------------------------------------------------------

def conv_bn_kernel(p_ref, w_ref, b_ref, g_ref, beta_ref, o_ref, *, eps):
    """Fused im2col-matmul + bias + training-mode BatchNorm.

    p: (M, K) patches, w: (K, C), b/g/beta: (1, C).  Batch statistics are
    computed over all M rows in a single pass (sum and sum-of-squares).
    """
    y = jnp.dot(p_ref[...], w_ref[...], preferred_element_type=jnp.float32)
    y = y + b_ref[...]
    m_rows = y.shape[0]                       # static
    inv_m = jnp.float32(1.0 / m_rows)
    s = jnp.sum(y, axis=0, keepdims=True)
    sq = jnp.sum(y * y, axis=0, keepdims=True)
    mean = s * inv_m
    var = sq * inv_m - mean * mean            # biased variance, as torch uses
    scale = jax.lax.rsqrt(var + eps) * g_ref[...]
    o_ref[...] = (y - mean) * scale + beta_ref[...]


def conv_bn(patches, w_mat, bias, gamma, beta, eps=EPS):
    """(M,K)@(K,C)+bias then per-channel batchnorm -> (M,C), all f32."""
    M = patches.shape[0]
    C = w_mat.shape[1]
    return pl.pallas_call(
        functools.partial(conv_bn_kernel, eps=eps),
        out_shape=jax.ShapeDtypeStruct((M, C), jnp.float32),
        in_specs=[_vmem_spec() for _ in range(5)],
        out_specs=_vmem_spec(),
    )(patches, w_mat, bias, gamma, beta)


def fc_softmax_kernel(x_ref, w1_ref, b1_ref, w2_ref, b2_ref, o_ref):
    """Fused fc1 -> fc2 -> softmax on a row tile kept entirely in VMEM."""
    h = jnp.dot(x_ref[...], w1_ref[...], preferred_element_type=jnp.float32)
    h = h + b1_ref[...]
    logits = jnp.dot(h, w2_ref[...], preferred_element_type=jnp.float32)
    logits = logits + b2_ref[...]
    # Numerically stable softmax: identical to exp(x)/sum(exp(x)) of the
    # reference module; reciprocal goes to the EUP slot.
    z = logits - jnp.max(logits, axis=1, keepdims=True)
    ez = jnp.exp(z)
    inv_sum = pl.reciprocal(jnp.sum(ez, axis=1, keepdims=True), approx=True)
    o_ref[...] = ez * inv_sum


def fc_softmax(x, w1_t, b1, w2_t, b2, *, block_rows=512):
    """x: (N, K) NHWC-flattened features -> (N, num_classes) softmax probs."""
    N, K = x.shape
    H = w1_t.shape[1]
    C = w2_t.shape[1]
    # Row tile: full extent for tiny N, otherwise a multiple of 8 for tiling.
    bm = block_rows if (N % block_rows == 0) else N
    grid = (N // bm,)
    return pl.pallas_call(
        fc_softmax_kernel,
        out_shape=jax.ShapeDtypeStruct((N, C), jnp.float32),
        grid=grid,
        in_specs=[
            pl.BlockSpec((bm, K), lambda i: (i, 0)),
            pl.BlockSpec((K, H), lambda i: (0, 0)),
            pl.BlockSpec((1, H), lambda i: (0, 0)),
            pl.BlockSpec((H, C), lambda i: (0, 0)),
            pl.BlockSpec((1, C), lambda i: (0, 0)),
        ],
        out_specs=pl.BlockSpec((bm, C), lambda i: (i, 0)),
        compiler_params=pltpu.CompilerParams(
            dimension_semantics=("parallel",)),
    )(x, w1_t, b1, w2_t, b2)


# ----------------------------------------------------------------------------
# Glue: NHWC im2col (strided slices + concat, no transposes), parameter init
# ----------------------------------------------------------------------------

def im2col_nhwc(x, k, stride):
    """x: (N, H, W, C) -> patches (N*OH*OW, k*k*C); column order (kh, kw, c)."""
    N, H, W, C = x.shape
    OH = (H - k) // stride + 1
    OW = (W - k) // stride + 1
    cols = []
    for kh in range(k):
        for kw in range(k):
            cols.append(
                jax.lax.slice(
                    x,
                    (0, kh, kw, 0),
                    (N, kh + stride * (OH - 1) + 1, kw + stride * (OW - 1) + 1, C),
                    (1, stride, stride, 1)))
    patches = jnp.concatenate(cols, axis=-1)          # (N, OH, OW, k*k*C)
    return patches.reshape(N * OH * OW, k * k * C), OH, OW


def xavier_uniform(key, shape, fan_in, fan_out):
    bound = jnp.sqrt(6.0 / (fan_in + fan_out))
    return jax.random.uniform(key, shape, jnp.float32, -bound, bound)


def init_params(key, num_classes=10):
    """Create torch-layout weights, then pre-layout them for the kernels."""
    ks = jax.random.split(key, 4)

    # torch layouts ----------------------------------------------------------
    w1 = xavier_uniform(ks[0], (16, 1, 3, 3), 1 * 9, 16 * 9)        # (Cout,Cin,K,K)
    w2 = xavier_uniform(ks[1], (32, 16, 3, 3), 16 * 9, 32 * 9)
    wf1 = xavier_uniform(ks[2], (128, 32 * 6 * 6), 32 * 6 * 6, 128)  # (out,in) NCHW-flatten
    wf2 = xavier_uniform(ks[3], (num_classes, 128), 128, num_classes)

    # pre-layout for kernels (done once, not per forward) --------------------
    params = {}
    # conv weights -> (K*K*Cin, Cout) matching im2col column order (kh,kw,c)
    params["w1m"] = w1.transpose(2, 3, 1, 0).reshape(9 * 1, 16)
    params["w2m"] = w2.transpose(2, 3, 1, 0).reshape(9 * 16, 32)
    params["b1"] = jnp.zeros((1, 16), jnp.float32)
    params["g1"] = jnp.ones((1, 16), jnp.float32)
    params["be1"] = jnp.zeros((1, 16), jnp.float32)
    params["b2"] = jnp.zeros((1, 32), jnp.float32)
    params["g2"] = jnp.ones((1, 32), jnp.float32)
    params["be2"] = jnp.zeros((1, 32), jnp.float32)

    # fc1 consumes the torch NCHW flatten (c,h,w); our features are flattened
    # NHWC (h,w,c).  Permute fc1's columns once so the NHWC flatten gives the
    # identical result with zero per-call transposes.
    C2, OH2, OW2 = 32, 6, 6
    hh = jnp.arange(OH2).reshape(OH2, 1, 1)
    ww = jnp.arange(OW2).reshape(1, OW2, 1)
    cc = jnp.arange(C2).reshape(1, 1, C2)
    perm = (cc * (OH2 * OW2) + hh * OW2 + ww).reshape(-1)   # nhwc idx -> nchw idx
    params["wf1t"] = wf1[:, perm].T                          # (1152, 128)
    params["bf1"] = jnp.zeros((1, 128), jnp.float32)
    params["wf2t"] = wf2.T                                   # (128, num_classes)
    params["bf2"] = jnp.zeros((1, num_classes), jnp.float32)
    return params


@jax.jit
def neural_net_forward(x, params):
    """x: (N, 1, 28, 28) float32 NCHW -> (N, num_classes) softmax probs."""
    N = x.shape[0]
    x = jnp.transpose(x, (0, 2, 3, 1))                       # one-time NCHW->NHWC (Cin=1)

    # conv1 + bn1 (training-mode batch statistics), fused kernel
    p1, oh1, ow1 = im2col_nhwc(x, 3, 2)                      # (N*13*13, 9)
    y1 = conv_bn(p1, params["w1m"], params["b1"], params["g1"], params["be1"])
    y1 = y1.reshape(N, oh1, ow1, 16)                         # stay NHWC

    # conv2 + bn2, fused kernel
    p2, oh2, ow2 = im2col_nhwc(y1, 3, 2)                     # (N*6*6, 144)
    y2 = conv_bn(p2, params["w2m"], params["b2"], params["g2"], params["be2"])

    # NHWC flatten (h, w, c); fc1 weight columns were permuted at init to match.
    feat = y2.reshape(N, oh2 * ow2 * 32)

    # fc1 -> fc2 -> softmax, fused kernel
    return fc_softmax(feat, params["wf1t"], params["bf1"],
                      params["wf2t"], params["bf2"])


if __name__ == "__main__":
    num_classes = 10
    key = jax.random.PRNGKey(0)
    k_params, k_x = jax.random.split(key)
    params = init_params(k_params, num_classes)
    # 28x28 input is implied by fc1 = Linear(32*6*6, 128) with two stride-2 3x3 convs.
    x = jax.random.normal(k_x, (2, 1, 28, 28), jnp.float32)

    y = neural_net_forward(x, params)
    y = jax.block_until_ready(y)

    assert y.shape == (2, num_classes)
    assert bool(jnp.all(y >= 0.0)) and bool(jnp.all(y <= 1.0))
    # softmax rows sum to ~1 (approx EUP reciprocal -> slightly relaxed tol)
    assert bool(jnp.all(jnp.abs(jnp.sum(y, axis=1) - 1.0) < 5e-3))
    print("KERNEL_OK")
</pallas_src>

<mosaic_0001>
module attributes {stable_mosaic.version = 11 : i64} {
  func.func @conv_bn_kernel(%arg0: memref<338x9xf32, #tpu.memory_space<vmem>>, %arg1: memref<9x16xf32, #tpu.memory_space<vmem>>, %arg2: memref<1x16xf32, #tpu.memory_space<vmem>>, %arg3: memref<1x16xf32, #tpu.memory_space<vmem>>, %arg4: memref<1x16xf32, #tpu.memory_space<vmem>>, %arg5: memref<338x16xf32, #tpu.memory_space<vmem>>) attributes {dimension_semantics = [], scalar_prefetch = 0 : i64, scratch_operands = 0 : i64, tpu.core_type = #tpu.core_type<tc>} {
    %c0 = arith.constant 0 : index
    %c0_0 = arith.constant 0 : index
    %0 = vector.load %arg0[%c0, %c0_0] : memref<338x9xf32, #tpu.memory_space<vmem>>, vector<338x9xf32>
    %c0_1 = arith.constant 0 : index
    %c0_2 = arith.constant 0 : index
    %1 = vector.load %arg1[%c0_1, %c0_2] : memref<9x16xf32, #tpu.memory_space<vmem>>, vector<9x16xf32>
    %cst = arith.constant dense<0.000000e+00> : vector<338x16xf32>
    %2 = tpu.matmul %0, %1, %cst {dimension_numbers = #tpu.dot_dimension_numbers<[1], [0], [0], [1], [0, 0, 1, 1], [], []>} : vector<338x9xf32>, vector<9x16xf32>, vector<338x16xf32> -> vector<338x16xf32>
    %c0_3 = arith.constant 0 : index
    %c0_4 = arith.constant 0 : index
    %3 = vector.load %arg2[%c0_3, %c0_4] : memref<1x16xf32, #tpu.memory_space<vmem>>, vector<1x16xf32>
    %4 = vector.broadcast %3 : vector<1x16xf32> to vector<338x16xf32>
    %5 = arith.addf %2, %4 : vector<338x16xf32>
    %cst_5 = arith.constant dense<0.000000e+00> : vector<16xf32>
    %6 = vector.multi_reduction <add>, %5, %cst_5 [0] : vector<338x16xf32> to vector<16xf32>
    %7 = vector.shape_cast %6 : vector<16xf32> to vector<1x16xf32>
    %8 = arith.mulf %5, %5 : vector<338x16xf32>
    %cst_6 = arith.constant dense<0.000000e+00> : vector<16xf32>
    %9 = vector.multi_reduction <add>, %8, %cst_6 [0] : vector<338x16xf32> to vector<16xf32>
    %10 = vector.shape_cast %9 : vector<16xf32> to vector<1x16xf32>
    %cst_7 = arith.constant 2.958580e-03 : f32
    %11 = vector.broadcast %cst_7 : f32 to vector<1x16xf32>
    %12 = arith.mulf %7, %11 : vector<1x16xf32>
    %cst_8 = arith.constant 2.958580e-03 : f32
    %13 = vector.broadcast %cst_8 : f32 to vector<1x16xf32>
    %14 = arith.mulf %10, %13 : vector<1x16xf32>
    %15 = arith.mulf %12, %12 : vector<1x16xf32>
    %16 = arith.subf %14, %15 : vector<1x16xf32>
    %cst_9 = arith.constant 9.99999974E-6 : f32
    %17 = vector.broadcast %cst_9 : f32 to vector<1x16xf32>
    %18 = arith.addf %16, %17 : vector<1x16xf32>
    %19 = math.rsqrt %18 : vector<1x16xf32>
    %c0_10 = arith.constant 0 : index
    %c0_11 = arith.constant 0 : index
    %20 = vector.load %arg3[%c0_10, %c0_11] : memref<1x16xf32, #tpu.memory_space<vmem>>, vector<1x16xf32>
    %21 = arith.mulf %19, %20 : vector<1x16xf32>
    %22 = vector.broadcast %12 : vector<1x16xf32> to vector<338x16xf32>
    %23 = arith.subf %5, %22 : vector<338x16xf32>
    %24 = vector.broadcast %21 : vector<1x16xf32> to vector<338x16xf32>
    %25 = arith.mulf %23, %24 : vector<338x16xf32>
    %c0_12 = arith.constant 0 : index
    %c0_13 = arith.constant 0 : index
    %26 = vector.load %arg4[%c0_12, %c0_13] : memref<1x16xf32, #tpu.memory_space<vmem>>, vector<1x16xf32>
    %27 = vector.broadcast %26 : vector<1x16xf32> to vector<338x16xf32>
    %28 = arith.addf %25, %27 : vector<338x16xf32>
    %c0_14 = arith.constant 0 : index
    %c0_15 = arith.constant 0 : index
    %29 = vector.load %arg5[%c0_14, %c0_15] : memref<338x16xf32, #tpu.memory_space<vmem>>, vector<338x16xf32>
    tpu.vector_store %arg5[%c0_14, %c0_15], %28 {strides = array<i32>} : memref<338x16xf32, #tpu.memory_space<vmem>>, vector<338x16xf32>,
    return
  }
}

module attributes {stable_mosaic.version = 11 : i64} {
  func.func @conv_bn_kernel(%arg0: memref<72x144xf32, #tpu.memory_space<vmem>>, %arg1: memref<144x32xf32, #tpu.memory_space<vmem>>, %arg2: memref<1x32xf32, #tpu.memory_space<vmem>>, %arg3: memref<1x32xf32, #tpu.memory_space<vmem>>, %arg4: memref<1x32xf32, #tpu.memory_space<vmem>>, %arg5: memref<72x32xf32, #tpu.memory_space<vmem>>) attributes {dimension_semantics = [], scalar_prefetch = 0 : i64, scratch_operands = 0 : i64, tpu.core_type = #tpu.core_type<tc>} {
    %c0 = arith.constant 0 : index
    %c0_0 = arith.constant 0 : index
    %0 = vector.load %arg0[%c0, %c0_0] : memref<72x144xf32, #tpu.memory_space<vmem>>, vector<72x144xf32>
    %c0_1 = arith.constant 0 : index
    %c0_2 = arith.constant 0 : index
    %1 = vector.load %arg1[%c0_1, %c0_2] : memref<144x32xf32, #tpu.memory_space<vmem>>, vector<144x32xf32>
    %cst = arith.constant dense<0.000000e+00> : vector<72x32xf32>
    %2 = tpu.matmul %0, %1, %cst {dimension_numbers = #tpu.dot_dimension_numbers<[1], [0], [0], [1], [0, 0, 1, 1], [], []>} : vector<72x144xf32>, vector<144x32xf32>, vector<72x32xf32> -> vector<72x32xf32>
    %c0_3 = arith.constant 0 : index
    %c0_4 = arith.constant 0 : index
    %3 = vector.load %arg2[%c0_3, %c0_4] : memref<1x32xf32, #tpu.memory_space<vmem>>, vector<1x32xf32>
    %4 = vector.broadcast %3 : vector<1x32xf32> to vector<72x32xf32>
    %5 = arith.addf %2, %4 : vector<72x32xf32>
    %cst_5 = arith.constant dense<0.000000e+00> : vector<32xf32>
    %6 = vector.multi_reduction <add>, %5, %cst_5 [0] : vector<72x32xf32> to vector<32xf32>
    %7 = vector.shape_cast %6 : vector<32xf32> to vector<1x32xf32>
    %8 = arith.mulf %5, %5 : vector<72x32xf32>
    %cst_6 = arith.constant dense<0.000000e+00> : vector<32xf32>
    %9 = vector.multi_reduction <add>, %8, %cst_6 [0] : vector<72x32xf32> to vector<32xf32>
    %10 = vector.shape_cast %9 : vector<32xf32> to vector<1x32xf32>
    %cst_7 = arith.constant 0.013888889 : f32
    %11 = vector.broadcast %cst_7 : f32 to vector<1x32xf32>
    %12 = arith.mulf %7, %11 : vector<1x32xf32>
    %cst_8 = arith.constant 0.013888889 : f32
    %13 = vector.broadcast %cst_8 : f32 to vector<1x32xf32>
    %14 = arith.mulf %10, %13 : vector<1x32xf32>
    %15 = arith.mulf %12, %12 : vector<1x32xf32>
    %16 = arith.subf %14, %15 : vector<1x32xf32>
    %cst_9 = arith.constant 9.99999974E-6 : f32
    %17 = vector.broadcast %cst_9 : f32 to vector<1x32xf32>
    %18 = arith.addf %16, %17 : vector<1x32xf32>
    %19 = math.rsqrt %18 : vector<1x32xf32>
    %c0_10 = arith.constant 0 : index
    %c0_11 = arith.constant 0 : index
    %20 = vector.load %arg3[%c0_10, %c0_11] : memref<1x32xf32, #tpu.memory_space<vmem>>, vector<1x32xf32>
    %21 = arith.mulf %19, %20 : vector<1x32xf32>
    %22 = vector.broadcast %12 : vector<1x32xf32> to vector<72x32xf32>
    %23 = arith.subf %5, %22 : vector<72x32xf32>
    %24 = vector.broadcast %21 : vector<1x32xf32> to vector<72x32xf32>
    %25 = arith.mulf %23, %24 : vector<72x32xf32>
    %c0_12 = arith.constant 0 : index
    %c0_13 = arith.constant 0 : index
    %26 = vector.load %arg4[%c0_12, %c0_13] : memref<1x32xf32, #tpu.memory_space<vmem>>, vector<1x32xf32>
    %27 = vector.broadcast %26 : vector<1x32xf32> to vector<72x32xf32>
    %28 = arith.addf %25, %27 : vector<72x32xf32>
    %c0_14 = arith.constant 0 : index
    %c0_15 = arith.constant 0 : index
    %29 = vector.load %arg5[%c0_14, %c0_15] : memref<72x32xf32, #tpu.memory_space<vmem>>, vector<72x32xf32>
    tpu.vector_store %arg5[%c0_14, %c0_15], %28 {strides = array<i32>} : memref<72x32xf32, #tpu.memory_space<vmem>>, vector<72x32xf32>,
    return
  }
}

module attributes {stable_mosaic.version = 11 : i64} {
  func.func @fc_softmax_kernel(%arg0: i32, %arg1: memref<2x1152xf32, #tpu.memory_space<vmem>>, %arg2: memref<1152x128xf32, #tpu.memory_space<vmem>>, %arg3: memref<1x128xf32, #tpu.memory_space<vmem>>, %arg4: memref<128x10xf32, #tpu.memory_space<vmem>>, %arg5: memref<1x10xf32, #tpu.memory_space<vmem>>, %arg6: memref<2x10xf32, #tpu.memory_space<vmem>>) attributes {dimension_semantics = [#tpu.dimension_semantics<parallel>], iteration_bounds = array<i64: 1>, scalar_prefetch = 0 : i64, scratch_operands = 0 : i64, tpu.core_type = #tpu.core_type<tc>, window_params = [{transform_indices = @transform_0, window_bounds = array<i64: 2, 1152>}, {pipeline_mode = #tpu.pipeline_mode<synchronous>, transform_indices = @transform_1, window_bounds = array<i64: 1152, 128>}, {pipeline_mode = #tpu.pipeline_mode<synchronous>, transform_indices = @transform_2, window_bounds = array<i64: 1, 128>}, {pipeline_mode = #tpu.pipeline_mode<synchronous>, transform_indices = @transform_3, window_bounds = array<i64: 128, 10>}, {pipeline_mode = #tpu.pipeline_mode<synchronous>, transform_indices = @transform_4, window_bounds = array<i64: 1, 10>}, {transform_indices = @transform_5, window_bounds = array<i64: 2, 10>}]} {
    %c0 = arith.constant 0 : index
    %c0_0 = arith.constant 0 : index
    %0 = vector.load %arg1[%c0, %c0_0] : memref<2x1152xf32, #tpu.memory_space<vmem>>, vector<2x1152xf32>
    %c0_1 = arith.constant 0 : index
    %c0_2 = arith.constant 0 : index
    %1 = vector.load %arg2[%c0_1, %c0_2] : memref<1152x128xf32, #tpu.memory_space<vmem>>, vector<1152x128xf32>
    %cst = arith.constant dense<0.000000e+00> : vector<2x128xf32>
    %2 = tpu.matmul %0, %1, %cst {dimension_numbers = #tpu.dot_dimension_numbers<[1], [0], [0], [1], [0, 0, 1, 1], [], []>} : vector<2x1152xf32>, vector<1152x128xf32>, vector<2x128xf32> -> vector<2x128xf32>
    %c0_3 = arith.constant 0 : index
    %c0_4 = arith.constant 0 : index
    %3 = vector.load %arg3[%c0_3, %c0_4] : memref<1x128xf32, #tpu.memory_space<vmem>>, vector<1x128xf32>
    %4 = vector.broadcast %3 : vector<1x128xf32> to vector<2x128xf32>
    %5 = arith.addf %2, %4 : vector<2x128xf32>
    %c0_5 = arith.constant 0 : index
    %c0_6 = arith.constant 0 : index
    %6 = vector.load %arg4[%c0_5, %c0_6] : memref<128x10xf32, #tpu.memory_space<vmem>>, vector<128x10xf32>
    %cst_7 = arith.constant dense<0.000000e+00> : vector<2x10xf32>
    %7 = tpu.matmul %5, %6, %cst_7 {dimension_numbers = #tpu.dot_dimension_numbers<[1], [0], [0], [1], [0, 0, 1, 1], [], []>} : vector<2x128xf32>, vector<128x10xf32>, vector<2x10xf32> -> vector<2x10xf32>
    %c0_8 = arith.constant 0 : index
    %c0_9 = arith.constant 0 : index
    %8 = vector.load %arg5[%c0_8, %c0_9] : memref<1x10xf32, #tpu.memory_space<vmem>>, vector<1x10xf32>
    %9 = vector.broadcast %8 : vector<1x10xf32> to vector<2x10xf32>
    %10 = arith.addf %7, %9 : vector<2x10xf32>
    %cst_10 = arith.constant dense<0xFF800000> : vector<2xf32>
    %11 = vector.multi_reduction <maximumf>, %10, %cst_10 [1] : vector<2x10xf32> to vector<2xf32>
    %12 = vector.shape_cast %11 : vector<2xf32> to vector<2x1xf32>
    %13 = vector.broadcast %12 : vector<2x1xf32> to vector<2x10xf32>
    %14 = arith.subf %10, %13 : vector<2x10xf32>
    %15 = math.exp %14 : vector<2x10xf32>
    %cst_11 = arith.constant dense<0.000000e+00> : vector<2xf32>
    %16 = vector.multi_reduction <add>, %15, %cst_11 [1] : vector<2x10xf32> to vector<2xf32>
    %17 = vector.shape_cast %16 : vector<2xf32> to vector<2x1xf32>
    %18 = tpu.reciprocal %17 {approx = true} : vector<2x1xf32> -> vector<2x1xf32>
    %19 = vector.broadcast %18 : vector<2x1xf32> to vector<2x10xf32>
    %20 = arith.mulf %15, %19 : vector<2x10xf32>
    %c0_12 = arith.constant 0 : index
    %c0_13 = arith.constant 0 : index
    %21 = vector.load %arg6[%c0_12, %c0_13] : memref<2x10xf32, #tpu.memory_space<vmem>>, vector<2x10xf32>
    tpu.vector_store %arg6[%c0_12, %c0_13], %20 {strides = array<i32>} : memref<2x10xf32, #tpu.memory_space<vmem>>, vector<2x10xf32>,
    return
  }
  func.func @transform_0(%arg0: i32) -> (i32, i32) {
    %c0_i32 = arith.constant 0 : i32
    %c0_i32_0 = arith.constant 0 : i32
    return %arg0, %c0_i32 : i32, i32
  }
  func.func @transform_1(%arg0: i32) -> (i32, i32) {
    %c0_i32 = arith.constant 0 : i32
    %c0_i32_0 = arith.constant 0 : i32
    %c0_i32_1 = arith.constant 0 : i32
    return %c0_i32, %c0_i32_0 : i32, i32
  }
  func.func @transform_2(%arg0: i32) -> (i32, i32) {
    %c0_i32 = arith.constant 0 : i32
    %c0_i32_0 = arith.constant 0 : i32
    %c0_i32_1 = arith.constant 0 : i32
    return %c0_i32, %c0_i32_0 : i32, i32
  }
  func.func @transform_3(%arg0: i32) -> (i32, i32) {
    %c0_i32 = arith.constant 0 : i32
    %c0_i32_0 = arith.constant 0 : i32
    %c0_i32_1 = arith.constant 0 : i32
    return %c0_i32, %c0_i32_0 : i32, i32
  }
  func.func @transform_4(%arg0: i32) -> (i32, i32) {
    %c0_i32 = arith.constant 0 : i32
    %c0_i32_0 = arith.constant 0 : i32
    %c0_i32_1 = arith.constant 0 : i32
    return %c0_i32, %c0_i32_0 : i32, i32
  }
  func.func @transform_5(%arg0: i32) -> (i32, i32) {
    %c0_i32 = arith.constant 0 : i32
    %c0_i32_0 = arith.constant 0 : i32
    return %arg0, %c0_i32 : i32, i32
  }
}

</mosaic_0001>

<llo_original>
// kernel: neural_net_forward.3
$region0: #{neural_net_forward.3}
  #allocation0 [shape = 'u32[]', space=smem, size = 0x4, offset = 0x4, fixed_abs, tag = 'smem constant byte address 0x4 - core index']
  #allocation1 [shape = 'u32[144,128]{1,0:T(1,128)}', space=vmem, size = 0x12000, scoped, tag = 'internal scratch']
  %s0 = inlined_call_operand.vmem [shape: f32[338,9], index: 0, kind: input, shape index: {}]
  %s1 = inlined_call_operand.vmem [shape: f32[9,16], index: 1, kind: input, shape index: {}]
  %s2 = inlined_call_operand.vmem [shape: f32[1,16], index: 2, kind: input, shape index: {}]
  %s3 = inlined_call_operand.vmem [shape: f32[1,16], index: 3, kind: input, shape index: {}]
  %s4 = inlined_call_operand.vmem [shape: f32[1,16], index: 4, kind: input, shape index: {}]
  %s5 = inlined_call_operand.vmem [shape: f32[338,16], index: 5, kind: output, shape index: {}]
  %s6 = sld [smem:[#allocation0]]
  $region30: #{neural_net_forward.3} parent=0
    _
  %s8 = ssub.s32 1, %s6
  %s9 = scalar_select 0, %s8, %s6
  // Predicated region
  $region2: #{neural_net_forward.3} parent=0 // pred_check
    _
  $region3: #{neural_net_forward.3} parent=0 // pred_check_branch
    %11 = sbr.rel (0) target = $region5
  $region4: #{neural_net_forward.3} parent=0 // pred_region
    _
  $region5: #{neural_net_forward.3} parent=0 // pred_fallthru
    _
  // Predicated region
  $region6: #{neural_net_forward.3} parent=0 // pred_check
    _
  $region7: #{neural_net_forward.3} parent=0 // pred_check_branch
    %13 = sbr.rel (0) target = $region9
  $region8: #{neural_net_forward.3} parent=0 // pred_region
    _
  $region9: #{neural_net_forward.3} parent=0 // pred_fallthru
    _
  // Predicated region
  $region10: #{neural_net_forward.3} parent=0 // pred_check
    _
  $region11: #{neural_net_forward.3} parent=0 // pred_check_branch
    %15 = sbr.rel (0) target = $region13
  $region12: #{neural_net_forward.3} parent=0 // pred_region
    _
  $region13: #{neural_net_forward.3} parent=0 // pred_fallthru
    _
  // Predicated region
  $region14: #{neural_net_forward.3} parent=0 // pred_check
    _
  $region15: #{neural_net_forward.3} parent=0 // pred_check_branch
    %17 = sbr.rel (0) target = $region17
  $region16: #{neural_net_forward.3} parent=0 // pred_region
    _
  $region17: #{neural_net_forward.3} parent=0 // pred_fallthru
    _
  // Predicated region
  $region18: #{neural_net_forward.3} parent=0 // pred_check
    _
  $region19: #{neural_net_forward.3} parent=0 // pred_check_branch
    %19 = sbr.rel (0) target = $region21
  $region20: #{neural_net_forward.3} parent=0 // pred_region
    _
  $region21: #{neural_net_forward.3} parent=0 // pred_fallthru
    _
  %v20 = vld [vmem:[%s0] sm:$0xff]
  %v21 = vld [vmem:[%s0 + $0x8] sm:$0xff]
  %v22 = vld [vmem:[%s0 + $0x10] sm:$0xff]
  %v23 = vld [vmem:[%s0 + $0x18] sm:$0xff]
  %v24 = vld [vmem:[%s0 + $0x20] sm:$0xff]
  %v25 = vld [vmem:[%s0 + $0x28] sm:$0xff]
  %v26 = vld [vmem:[%s0 + $0x30] sm:$0xff]
  %v27 = vld [vmem:[%s0 + $0x38] sm:$0xff]
  %v28 = vld [vmem:[%s0 + $0x40] sm:$0xff]
  %v29 = vld [vmem:[%s0 + $0x48] sm:$0xff]
  %v30 = vld [vmem:[%s0 + $0x50] sm:$0xff]
  %v31 = vld [vmem:[%s0 + $0x58] sm:$0xff]
  %v32 = vld [vmem:[%s0 + $0x60] sm:$0xff]
  %v33 = vld [vmem:[%s0 + $0x68] sm:$0xff]
  %v34 = vld [vmem:[%s0 + $0x70] sm:$0xff]
  %v35 = vld [vmem:[%s0 + $0x78] sm:$0xff]
  %v36 = vld [vmem:[%s0 + $0x80] sm:$0xff]
  %v37 = vld [vmem:[%s0 + $0x88] sm:$0xff]
  %v38 = vld [vmem:[%s0 + $0x90] sm:$0xff]
  %v39 = vld [vmem:[%s0 + $0x98] sm:$0xff]
  %v40 = vld [vmem:[%s0 + $0xa0] sm:$0xff]
  %v41 = vld [vmem:[%s0 + $0xa8] sm:$0xff]
  %v42 = vld [vmem:[%s0 + $0xb0] sm:$0xff]
  %v43 = vld [vmem:[%s0 + $0xb8] sm:$0xff]
  %v44 = vld [vmem:[%s0 + $0xc0] sm:$0xff]
  %v45 = vld [vmem:[%s0 + $0xc8] sm:$0xff]
  %v46 = vld [vmem:[%s0 + $0xd0] sm:$0xff]
  %v47 = vld [vmem:[%s0 + $0xd8] sm:$0xff]
  %v48 = vld [vmem:[%s0 + $0xe0] sm:$0xff]
  %v49 = vld [vmem:[%s0 + $0xe8] sm:$0xff]
  %v50 = vld [vmem:[%s0 + $0xf0] sm:$0xff]
  %v51 = vld [vmem:[%s0 + $0xf8] sm:$0xff]
  %v52 = vld [vmem:[%s0 + $0x100] sm:$0xff]
  %v53 = vld [vmem:[%s0 + $0x108] sm:$0xff]
  %v54 = vld [vmem:[%s0 + $0x110] sm:$0xff]
  %v55 = vld [vmem:[%s0 + $0x118] sm:$0xff]
  %v56 = vld [vmem:[%s0 + $0x120] sm:$0xff]
  %v57 = vld [vmem:[%s0 + $0x128] sm:$0xff]
  %v58 = vld [vmem:[%s0 + $0x130] sm:$0xff]
  %v59 = vld [vmem:[%s0 + $0x138] sm:$0xff]
  %v60 = vld [vmem:[%s0 + $0x140] sm:$0xff]
  %v61 = vld [vmem:[%s0 + $0x148] sm:$0xff]
  %v62 = vld [vmem:[%s0 + $0x150] sm:$0x3]
  %v63 = vld [vmem:[%s1] sm:$0xff]
  %v64 = vld [vmem:[%s1 + $0x8] sm:$0x1]
  %v65 = vld [vmem:[%s2] sm:$0x1]
  %v67 = vlaneseq
  %v68 = vshrl.u32 %v67, 7
  %v69 = vsub.s32 0, %v68
  %v70 = vrot.slane %v65, %v69
  %vm72 = vcmask 72704
  %v74 = vsel %vm72, %v20, 0
  %v77 = vsel %vm72, %v21, 0
  %v80 = vsel %vm72, %v22, 0
  %v83 = vsel %vm72, %v23, 0
  %v86 = vsel %vm72, %v24, 0
  %v89 = vsel %vm72, %v25, 0
  %v92 = vsel %vm72, %v26, 0
  %v95 = vsel %vm72, %v27, 0
  %v98 = vsel %vm72, %v28, 0
  %v101 = vsel %vm72, %v29, 0
  %v104 = vsel %vm72, %v30, 0
  %v107 = vsel %vm72, %v31, 0
  %v110 = vsel %vm72, %v32, 0
  %v113 = vsel %vm72, %v33, 0
  %v116 = vsel %vm72, %v34, 0
  %v119 = vsel %vm72, %v35, 0
  %v122 = vsel %vm72, %v36, 0
  %v125 = vsel %vm72, %v37, 0
  %v128 = vsel %vm72, %v38, 0
  %v131 = vsel %vm72, %v39, 0
  %v134 = vsel %vm72, %v40, 0
  %v137 = vsel %vm72, %v41, 0
  %v140 = vsel %vm72, %v42, 0
  %v143 = vsel %vm72, %v43, 0
  %v146 = vsel %vm72, %v44, 0
  %v149 = vsel %vm72, %v45, 0
  %v152 = vsel %vm72, %v46, 0
  %v155 = vsel %vm72, %v47, 0
  %v158 = vsel %vm72, %v48, 0
  %v161 = vsel %vm72, %v49, 0
  %v164 = vsel %vm72, %v50, 0
  %v167 = vsel %vm72, %v51, 0
  %v170 = vsel %vm72, %v52, 0
  %v173 = vsel %vm72, %v53, 0
  %v176 = vsel %vm72, %v54, 0
  %v179 = vsel %vm72, %v55, 0
  %v182 = vsel %vm72, %v56, 0
  %v185 = vsel %vm72, %v57, 0
  %v188 = vsel %vm72, %v58, 0
  %v191 = vsel %vm72, %v59, 0
  %v194 = vsel %vm72, %v60, 0
  %v197 = vsel %vm72, %v61, 0
  %v200 = vsel %vm72, %v62, 0
  %vm202 = vcmask 1040384
  %v204 = vsel %vm202, %v64, 0
  %206 = vmatprep.subr.mxu0 0.0
  %207 = vmatpush1.msra.mxu0 %v63
  %208 = vmatprep.subr.mxu0 0.0
  %209 = vmatpush1.msra.mxu0 %v204
  %210 = vmatprep.subr.mxu0 0.0
  %211 = vmatpush1.msra.mxu0 0.0
  %212 = vmatprep.subr.mxu0 0.0
  %213 = vmatpush1.msra.mxu0 0.0
  %214 = vmatprep.subr.mxu0 0.0
  %215 = vmatpush1.msra.mxu0 0.0
  %216 = vmatprep.subr.mxu0 0.0
  %217 = vmatpush1.msra.mxu0 0.0
  %218 = vmatprep.subr.mxu0 0.0
  %219 = vmatpush1.msra.mxu0 0.0
  %220 = vmatprep.subr.mxu0 0.0
  %221 = vmatpush1.msra.mxu0 0.0
  %222 = vmatprep.subr.mxu0 0.0
  %223 = vmatpush1.msra.mxu0 0.0
  %224 = vmatprep.subr.mxu0 0.0
  %225 = vmatpush1.msra.mxu0 0.0
  %226 = vmatprep.subr.mxu0 0.0
  %227 = vmatpush1.msra.mxu0 0.0
  %228 = vmatprep.subr.mxu0 0.0
  %229 = vmatpush1.msra.mxu0 0.0
  %230 = vmatprep.subr.mxu0 0.0
  %231 = vmatpush1.msra.mxu0 0.0
  %232 = vmatprep.subr.mxu0 0.0
  %233 = vmatpush1.msra.mxu0 0.0
  %234 = vmatprep.subr.mxu0 0.0
  %235 = vmatpush1.msra.mxu0 0.0
  %236 = vmatprep.subr.mxu0 0.0
  %237 = vmatpush1.msra.mxu0 0.0
  %238 = vmatprep.subr.mxu0 0.0
  %239 = vmatpush1.msra.mxu0 0.0
  %240 = vmatprep.subr.mxu0 0.0
  %241 = vmatpush1.msra.mxu0 0.0
  %242 = vmatprep.subr.mxu0 0.0
  %243 = vmatpush1.msra.mxu0 0.0
  %244 = vmatprep.subr.mxu0 0.0
  %245 = vmatpush1.msra.mxu0 0.0
  %246 = vmatprep.subr.mxu0 0.0
  %247 = vmatpush1.msra.mxu0 0.0
  %248 = vmatprep.subr.mxu0 0.0
  %249 = vmatpush1.msra.mxu0 0.0
  %250 = vmatprep.subr.mxu0 0.0
  %251 = vmatpush1.msra.mxu0 0.0
  %252 = vmatprep.subr.mxu0 0.0
  %253 = vmatpush1.msra.mxu0 0.0
  %254 = vmatprep.subr.mxu0 0.0
  %255 = vmatpush1.msra.mxu0 0.0
  %256 = vmatprep.subr.mxu0 0.0
  %257 = vmatpush1.msra.mxu0 0.0
  %258 = vmatprep.subr.mxu0 0.0
  %259 = vmatpush1.msra.mxu0 0.0
  %260 = vmatprep.subr.mxu0 0.0
  %261 = vmatpush1.msra.mxu0 0.0
  %262 = vmatprep.subr.mxu0 0.0
  %263 = vmatpush1.msra.mxu0 0.0
  %264 = vmatprep.subr.mxu0 0.0
  %265 = vmatpush1.msra.mxu0 0.0
  %266 = vmatprep.subr.mxu0 0.0
  %267 = vmatpush1.msra.mxu0 0.0
  %268 = vmatprep.subr.mxu0 0.0
  %269 = vmatpush1.msra.mxu0 0.0
  %270 = vmatprep.mubr.f32.mxu0 0.0
  %271 = vmatmul.mubr.f32.gmra.mrb[0].mxu0 %v74
  %v272 = vpop.f32.mrb[0].mxu0
  %v273 = vadd.f32 %v70, %v272
  %v274 = vpop.f32.mrb[0].mxu0
  %275 = vmatprep.mubr.f32.mxu0 0.0
  %276 = vmatmul.mubr.f32.gmra.mrb[0].mxu0 %v77
  %v277 = vpop.f32.mrb[0].mxu0
  %v278 = vadd.f32 %v70, %v277
  %v279 = vpop.f32.mrb[0].mxu0
  %280 = vmatprep.mubr.f32.mxu0 0.0
  %281 = vmatmul.mubr.f32.gmra.mrb[0].mxu0 %v80
  %v282 = vpop.f32.mrb[0].mxu0
  %v283 = vadd.f32 %v70, %v282
  %v284 = vpop.f32.mrb[0].mxu0
  %285 = vmatprep.mubr.f32.mxu0 0.0
  %286 = vmatmul.mubr.f32.gmra.mrb[0].mxu0 %v83
  %v287 = vpop.f32.mrb[0].mxu0
  %v288 = vadd.f32 %v70, %v287
  %v289 = vpop.f32.mrb[0].mxu0
  %290 = vmatprep.mubr.f32.mxu0 0.0
  %291 = vmatmul.mubr.f32.gmra.mrb[0].mxu0 %v86
  %v292 = vpop.f32.mrb[0].mxu0
  %v293 = vadd.f32 %v70, %v292
  %v294 = vpop.f32.mrb[0].mxu0
  %295 = vmatprep.mubr.f32.mxu0 0.0
  %296 = vmatmul.mubr.f32.gmra.mrb[0].mxu0 %v89
  %v297 = vpop.f32.mrb[0].mxu0
  %v298 = vadd.f32 %v70, %v297
  %v299 = vpop.f32.mrb[0].mxu0
  %300 = vmatprep.mubr.f32.mxu0 0.0
  %301 = vmatmul.mubr.f32.gmra.mrb[0].mxu0 %v92
  %v302 = vpop.f32.mrb[0].mxu0
  %v303 = vadd.f32 %v70, %v302
  %v304 = vpop.f32.mrb[0].mxu0
  %305 = vmatprep.mubr.f32.mxu0 0.0
  %306 = vmatmul.mubr.f32.gmra.mrb[0].mxu0 %v95
  %v307 = vpop.f32.mrb[0].mxu0
  %v308 = vadd.f32 %v70, %v307
  %v309 = vpop.f32.mrb[0].mxu0
  %310 = vmatprep.mubr.f32.mxu0 0.0
  %311 = vmatmul.mubr.f32.gmra.mrb[0].mxu0 %v98
  %v312 = vpop.f32.mrb[0].mxu0
  %v313 = vadd.f32 %v70, %v312
  %v314 = vpop.f32.mrb[0].mxu0
  %315 = vmatprep.mubr.f32.mxu0 0.0
  %316 = vmatmul.mubr.f32.gmra.mrb[0].mxu0 %v101
  %v317 = vpop.f32.mrb[0].mxu0
  %v318 = vadd.f32 %v70, %v317
  %v319 = vpop.f32.mrb[0].mxu0
  %320 = vmatprep.mubr.f32.mxu0 0.0
  %321 = vmatmul.mubr.f32.gmra.mrb[0].mxu0 %v104
  %v322 = vpop.f32.mrb[0].mxu0
  %v323 = vadd.f32 %v70, %v322
  %v324 = vpop.f32.mrb[0].mxu0
  %325 = vmatprep.mubr.f32.mxu0 0.0
  %326 = vmatmul.mubr.f32.gmra.mrb[0].mxu0 %v107
  %v327 = vpop.f32.mrb[0].mxu0
  %v328 = vadd.f32 %v70, %v327
  %v329 = vpop.f32.mrb[0].mxu0
  %330 = vmatprep.mubr.f32.mxu0 0.0
  %331 = vmatmul.mubr.f32.gmra.mrb[0].mxu0 %v110
  %v332 = vpop.f32.mrb[0].mxu0
  %v333 = vadd.f32 %v70, %v332
  %v334 = vpop.f32.mrb[0].mxu0
  %335 = vmatprep.mubr.f32.mxu0 0.0
  %336 = vmatmul.mubr.f32.gmra.mrb[0].mxu0 %v113
  %v337 = vpop.f32.mrb[0].mxu0
  %v338 = vadd.f32 %v70, %v337
  %v339 = vpop.f32.mrb[0].mxu0
  %340 = vmatprep.mubr.f32.mxu0 0.0
  %341 = vmatmul.mubr.f32.gmra.mrb[0].mxu0 %v116
  %v342 = vpop.f32.mrb[0].mxu0
  %v343 = vadd.f32 %v70, %v342
  %v344 = vpop.f32.mrb[0].mxu0
  %345 = vmatprep.mubr.f32.mxu0 0.0
  %346 = vmatmul.mubr.f32.gmra.mrb[0].mxu0 %v119
  %v347 = vpop.f32.mrb[0].mxu0
  %v348 = vadd.f32 %v70, %v347
  %v349 = vpop.f32.mrb[0].mxu0
  %350 = vmatprep.mubr.f32.mxu0 0.0
  %351 = vmatmul.mubr.f32.gmra.mrb[0].mxu0 %v122
  %v352 = vpop.f32.mrb[0].mxu0
  %v353 = vadd.f32 %v70, %v352
  %v354 = vpop.f32.mrb[0].mxu0
  %355 = vmatprep.mubr.f32.mxu0 0.0
  %356 = vmatmul.mubr.f32.gmra.mrb[0].mxu0 %v125
  %v357 = vpop.f32.mrb[0].mxu0
  %v358 = vadd.f32 %v70, %v357
  %v359 = vpop.f32.mrb[0].mxu0
  %360 = vmatprep.mubr.f32.mxu0 0.0
  %361 = vmatmul.mubr.f32.gmra.mrb[0].mxu0 %v128
  %v362 = vpop.f32.mrb[0].mxu0
  %v363 = vadd.f32 %v70, %v362
  %v364 = vpop.f32.mrb[0].mxu0
  %365 = vmatprep.mubr.f32.mxu0 0.0
  %366 = vmatmul.mubr.f32.gmra.mrb[0].mxu0 %v131
  %v367 = vpop.f32.mrb[0].mxu0
  %v368 = vadd.f32 %v70, %v367
  %v369 = vpop.f32.mrb[0].mxu0
  %370 = vmatprep.mubr.f32.mxu0 0.0
  %371 = vmatmul.mubr.f32.gmra.mrb[0].mxu0 %v134
  %v372 = vpop.f32.mrb[0].mxu0
  %v373 = vadd.f32 %v70, %v372
  %v374 = vpop.f32.mrb[0].mxu0
  %375 = vmatprep.mubr.f32.mxu0 0.0
  %376 = vmatmul.mubr.f32.gmra.mrb[0].mxu0 %v137
  %v377 = vpop.f32.mrb[0].mxu0
  %v378 = vadd.f32 %v70, %v377
  %v379 = vpop.f32.mrb[0].mxu0
  %380 = vmatprep.mubr.f32.mxu0 0.0
  %381 = vmatmul.mubr.f32.gmra.mrb[0].mxu0 %v140
  %v382 = vpop.f32.mrb[0].mxu0
  %v383 = vadd.f32 %v70, %v382
  %v384 = vpop.f32.mrb[0].mxu0
  %385 = vmatprep.mubr.f32.mxu0 0.0
  %386 = vmatmul.mubr.f32.gmra.mrb[0].mxu0 %v143
  %v387 = vpop.f32.mrb[0].mxu0
  %v388 = vadd.f32 %v70, %v387
  %v389 = vpop.f32.mrb[0].mxu0
  %390 = vmatprep.mubr.f32.mxu0 0.0
  %391 = vmatmul.mubr.f32.gmra.mrb[0].mxu0 %v146
  %v392 = vpop.f32.mrb[0].mxu0
  %v393 = vadd.f32 %v70, %v392
  %v394 = vpop.f32.mrb[0].mxu0
  %395 = vmatprep.mubr.f32.mxu0 0.0
  %396 = vmatmul.mubr.f32.gmra.mrb[0].mxu0 %v149
  %v397 = vpop.f32.mrb[0].mxu0
  %v398 = vadd.f32 %v70, %v397
  %v399 = vpop.f32.mrb[0].mxu0
  %400 = vmatprep.mubr.f32.mxu0 0.0
  %401 = vmatmul.mubr.f32.gmra.mrb[0].mxu0 %v152
  %v402 = vpop.f32.mrb[0].mxu0
  %v403 = vadd.f32 %v70, %v402
  %v404 = vpop.f32.mrb[0].mxu0
  %405 = vmatprep.mubr.f32.mxu0 0.0
  %406 = vmatmul.mubr.f32.gmra.mrb[0].mxu0 %v155
  %v407 = vpop.f32.mrb[0].mxu0
  %v408 = vadd.f32 %v70, %v407
  %v409 = vpop.f32.mrb[0].mxu0
  %410 = vmatprep.mubr.f32.mxu0 0.0
  %411 = vmatmul.mubr.f32.gmra.mrb[0].mxu0 %v158
  %v412 = vpop.f32.mrb[0].mxu0
  %v413 = vadd.f32 %v70, %v412
  %v414 = vpop.f32.mrb[0].mxu0
  %415 = vmatprep.mubr.f32.mxu0 0.0
  %416 = vmatmul.mubr.f32.gmra.mrb[0].mxu0 %v161
  %v417 = vpop.f32.mrb[0].mxu0
  %v418 = vadd.f32 %v70, %v417
  %v419 = vpop.f32.mrb[0].mxu0
  %420 = vmatprep.mubr.f32.mxu0 0.0
  %421 = vmatmul.mubr.f32.gmra.mrb[0].mxu0 %v164
  %v422 = vpop.f32.mrb[0].mxu0
  %v423 = vadd.f32 %v70, %v422
  %v424 = vpop.f32.mrb[0].mxu0
  %425 = vmatprep.mubr.f32.mxu0 0.0
  %426 = vmatmul.mubr.f32.gmra.mrb[0].mxu0 %v167
  %v427 = vpop.f32.mrb[0].mxu0
  %v428 = vadd.f32 %v70, %v427
  %v429 = vpop.f32.mrb[0].mxu0
  %430 = vmatprep.mubr.f32.mxu0 0.0
  %431 = vmatmul.mubr.f32.gmra.mrb[0].mxu0 %v170
  %v432 = vpop.f32.mrb[0].mxu0
  %v433 = vadd.f32 %v70, %v432
  %v434 = vpop.f32.mrb[0].mxu0
  %435 = vmatprep.mubr.f32.mxu0 0.0
  %436 = vmatmul.mubr.f32.gmra.mrb[0].mxu0 %v173
  %v437 = vpop.f32.mrb[0].mxu0
  %v438 = vadd.f32 %v70, %v437
  %v439 = vpop.f32.mrb[0].mxu0
  %440 = vmatprep.mubr.f32.mxu0 0.0
  %441 = vmatmul.mubr.f32.gmra.mrb[0].mxu0 %v176
  %v442 = vpop.f32.mrb[0].mxu0
  %v443 = vadd.f32 %v70, %v442
  %v444 = vpop.f32.mrb[0].mxu0
  %445 = vmatprep.mubr.f32.mxu0 0.0
  %446 = vmatmul.mubr.f32.gmra.mrb[0].mxu0 %v179
  %v447 = vpop.f32.mrb[0].mxu0
  %v448 = vadd.f32 %v70, %v447
  %v449 = vpop.f32.mrb[0].mxu0
  %450 = vmatprep.mubr.f32.mxu0 0.0
  %451 = vmatmul.mubr.f32.gmra.mrb[0].mxu0 %v182
  %v452 = vpop.f32.mrb[0].mxu0
  %v453 = vadd.f32 %v70, %v452
  %v454 = vpop.f32.mrb[0].mxu0
  %455 = vmatprep.mubr.f32.mxu0 0.0
  %456 = vmatmul.mubr.f32.gmra.mrb[0].mxu0 %v185
  %v457 = vpop.f32.mrb[0].mxu0
  %v458 = vadd.f32 %v70, %v457
  %v459 = vpop.f32.mrb[0].mxu0
  %460 = vmatprep.mubr.f32.mxu0 0.0
  %461 = vmatmul.mubr.f32.gmra.mrb[0].mxu0 %v188
  %v462 = vpop.f32.mrb[0].mxu0
  %v463 = vadd.f32 %v70, %v462
  %v464 = vpop.f32.mrb[0].mxu0
  %465 = vmatprep.mubr.f32.mxu0 0.0
  %466 = vmatmul.mubr.f32.gmra.mrb[0].mxu0 %v191
  %v467 = vpop.f32.mrb[0].mxu0
  %v468 = vadd.f32 %v70, %v467
  %v469 = vpop.f32.mrb[0].mxu0
  %470 = vmatprep.mubr.f32.mxu0 0.0
  %471 = vmatmul.mubr.f32.gmra.mrb[0].mxu0 %v194
  %v472 = vpop.f32.mrb[0].mxu0
  %v473 = vadd.f32 %v70, %v472
  %v474 = vpop.f32.mrb[0].mxu0
  %475 = vmatprep.mubr.f32.mxu0 0.0
  %476 = vmatmul.mubr.f32.gmra.mrb[0].mxu0 %v197
  %v477 = vpop.f32.mrb[0].mxu0
  %v478 = vadd.f32 %v70, %v477
  %v479 = vpop.f32.mrb[0].mxu0
  %480 = vmatprep.mubr.f32.mxu0 0.0
  %481 = vmatmul.mubr.f32.gmra.mrb[0].mxu0 %v200
  %v482 = vpop.f32.mrb[0].mxu0
  %v483 = vadd.f32 %v70, %v482
  %v484 = vpop.f32.mrb[0].mxu0
  %485 = vdwg.mxu0
  %vm486 = vcmask 130048
  %v487 = vsel %vm486, %v273, 0.0
  %v488 = vsel %vm486, %v278, 0.0
  %v489 = vadd.f32 %v487, %v488
  %v490 = vsel %vm486, %v283, 0.0
  %v491 = vadd.f32 %v489, %v490
  %v492 = vsel %vm486, %v288, 0.0
  %v493 = vadd.f32 %v491, %v492
  %v494 = vsel %vm486, %v293, 0.0
  %v495 = vadd.f32 %v493, %v494
  %v496 = vsel %vm486, %v298, 0.0
  %v497 = vadd.f32 %v495, %v496
  %v498 = vsel %vm486, %v303, 0.0
  %v499 = vadd.f32 %v497, %v498
  %v500 = vsel %vm486, %v308, 0.0
  %v501 = vadd.f32 %v499, %v500
  %v502 = vsel %vm486, %v313, 0.0
  %v503 = vadd.f32 %v501, %v502
  %v504 = vsel %vm486, %v318, 0.0
  %v505 = vadd.f32 %v503, %v504
  %v506 = vsel %vm486, %v323, 0.0
  %v507 = vadd.f32 %v505, %v506
  %v508 = vsel %vm486, %v328, 0.0
  %v509 = vadd.f32 %v507, %v508
  %v510 = vsel %vm486, %v333, 0.0
  %v511 = vadd.f32 %v509, %v510
  %v512 = vsel %vm486, %v338, 0.0
  %v513 = vadd.f32 %v511, %v512
  %v514 = vsel %vm486, %v343, 0.0
  %v515 = vadd.f32 %v513, %v514
  %v516 = vsel %vm486, %v348, 0.0
  %v517 = vadd.f32 %v515, %v516
  %v518 = vsel %vm486, %v353, 0.0
  %v519 = vadd.f32 %v517, %v518
  %v520 = vsel %vm486, %v358, 0.0
  %v521 = vadd.f32 %v519, %v520
  %v522 = vsel %vm486, %v363, 0.0
  %v523 = vadd.f32 %v521, %v522
  %v524 = vsel %vm486, %v368, 0.0
  %v525 = vadd.f32 %v523, %v524
  %v526 = vsel %vm486, %v373, 0.0
  %v527 = vadd.f32 %v525, %v526
  %v528 = vsel %vm486, %v378, 0.0
  %v529 = vadd.f32 %v527, %v528
  %v530 = vsel %vm486, %v383, 0.0
  %v531 = vadd.f32 %v529, %v530
  %v532 = vsel %vm486, %v388, 0.0
  %v533 = vadd.f32 %v531, %v532
  %v534 = vsel %vm486, %v393, 0.0
  %v535 = vadd.f32 %v533, %v534
  %v536 = vsel %vm486, %v398, 0.0
  %v537 = vadd.f32 %v535, %v536
  %v538 = vsel %vm486, %v403, 0.0
  %v539 = vadd.f32 %v537, %v538
  %v540 = vsel %vm486, %v408, 0.0
  %v541 = vadd.f32 %v539, %v540
  %v542 = vsel %vm486, %v413, 0.0
  %v543 = vadd.f32 %v541, %v542
  %v544 = vsel %vm486, %v418, 0.0
  %v545 = vadd.f32 %v543, %v544
  %v546 = vsel %vm486, %v423, 0.0
  %v547 = vadd.f32 %v545, %v546
  %v548 = vsel %vm486, %v428, 0.0
  %v549 = vadd.f32 %v547, %v548
  %v550 = vsel %vm486, %v433, 0.0
  %v551 = vadd.f32 %v549, %v550
  %v552 = vsel %vm486, %v438, 0.0
  %v553 = vadd.f32 %v551, %v552
  %v554 = vsel %vm486, %v443, 0.0
  %v555 = vadd.f32 %v553, %v554
  %v556 = vsel %vm486, %v448, 0.0
  %v557 = vadd.f32 %v555, %v556
  %v558 = vsel %vm486, %v453, 0.0
  %v559 = vadd.f32 %v557, %v558
  %v560 = vsel %vm486, %v458, 0.0
  %v561 = vadd.f32 %v559, %v560
  %v562 = vsel %vm486, %v463, 0.0
  %v563 = vadd.f32 %v561, %v562
  %v564 = vsel %vm486, %v468, 0.0
  %v565 = vadd.f32 %v563, %v564
  %v566 = vsel %vm486, %v473, 0.0
  %v567 = vadd.f32 %v565, %v566
  %v568 = vsel %vm486, %v478, 0.0
  %v569 = vadd.f32 %v567, %v568
  %vm570 = vcmask 123904
  %v571 = vsel %vm570, %v483, 0.0
  %v572 = vadd.f32 %v569, %v571
  %v573 = vrot.slane %v572, 4
  %v574 = vadd.f32 %v572, %v573
  %v575 = vrot.slane %v574, 2
  %v576 = vadd.f32 %v574, %v575
  %v577 = vrot.slane %v576, 1
  %v578 = vadd.f32 %v576, %v577
  %v579 = vmul.f32 %v273, %v273
  %v580 = vmul.f32 %v278, %v278
  %v581 = vmul.f32 %v283, %v283
  %v582 = vmul.f32 %v288, %v288
  %v583 = vmul.f32 %v293, %v293
  %v584 = vmul.f32 %v298, %v298
  %v585 = vmul.f32 %v303, %v303
  %v586 = vmul.f32 %v308, %v308
  %v587 = vmul.f32 %v313, %v313
  %v588 = vmul.f32 %v318, %v318
  %v589 = vmul.f32 %v323, %v323
  %v590 = vmul.f32 %v328, %v328
  %v591 = vmul.f32 %v333, %v333
  %v592 = vmul.f32 %v338, %v338
  %v593 = vmul.f32 %v343, %v343
  %v594 = vmul.f32 %v348, %v348
  %v595 = vmul.f32 %v353, %v353
  %v596 = vmul.f32 %v358, %v358
  %v597 = vmul.f32 %v363, %v363
  %v598 = vmul.f32 %v368, %v368
  %v599 = vmul.f32 %v373, %v373
  %v600 = vmul.f32 %v378, %v378
  %v601 = vmul.f32 %v383, %v383
  %v602 = vmul.f32 %v388, %v388
  %v603 = vmul.f32 %v393, %v393
  %v604 = vmul.f32 %v398, %v398
  %v605 = vmul.f32 %v403, %v403
  %v606 = vmul.f32 %v408, %v408
  %v607 = vmul.f32 %v413, %v413
  %v608 = vmul.f32 %v418, %v418
  %v609 = vmul.f32 %v423, %v423
  %v610 = vmul.f32 %v428, %v428
  %v611 = vmul.f32 %v433, %v433
  %v612 = vmul.f32 %v438, %v438
  %v613 = vmul.f32 %v443, %v443
  %v614 = vmul.f32 %v448, %v448
  %v615 = vmul.f32 %v453, %v453
  %v616 = vmul.f32 %v458, %v458
  %v617 = vmul.f32 %v463, %v463
  %v618 = vmul.f32 %v468, %v468
  %v619 = vmul.f32 %v473, %v473
  %v620 = vmul.f32 %v478, %v478
  %v621 = vmul.f32 %v483, %v483
  %v622 = vsel %vm486, %v579, 0.0
  %v623 = vsel %vm486, %v580, 0.0
  %v624 = vadd.f32 %v622, %v623
  %v625 = vsel %vm486, %v581, 0.0
  %v626 = vadd.f32 %v624, %v625
  %v627 = vsel %vm486, %v582, 0.0
  %v628 = vadd.f32 %v626, %v627
  %v629 = vsel %vm486, %v583, 0.0
  %v630 = vadd.f32 %v628, %v629
  %v631 = vsel %vm486, %v584, 0.0
  %v632 = vadd.f32 %v630, %v631
  %v633 = vsel %vm486, %v585, 0.0
  %v634 = vadd.f32 %v632, %v633
  %v635 = vsel %vm486, %v586, 0.0
  %v636 = vadd.f32 %v634, %v635
  %v637 = vsel %vm486, %v587, 0.0
  %v638 = vadd.f32 %v636, %v637
  %v639 = vsel %vm486, %v588, 0.0
  %v640 = vadd.f32 %v638, %v639
  %v641 = vsel %vm486, %v589, 0.0
  %v642 = vadd.f32 %v640, %v641
  %v643 = vsel %vm486, %v590, 0.0
  %v644 = vadd.f32 %v642, %v643
  %v645 = vsel %vm486, %v591, 0.0
  %v646 = vadd.f32 %v644, %v645
  %v647 = vsel %vm486, %v592, 0.0
  %v648 = vadd.f32 %v646, %v647
  %v649 = vsel %vm486, %v593, 0.0
  %v650 = vadd.f32 %v648, %v649
  %v651 = vsel %vm486, %v594, 0.0
  %v652 = vadd.f32 %v650, %v651
  %v653 = vsel %vm486, %v595, 0.0
  %v654 = vadd.f32 %v652, %v653
  %v655 = vsel %vm486, %v596, 0.0
  %v656 = vadd.f32 %v654, %v655
  %v657 = vsel %vm486, %v597, 0.0
  %v658 = vadd.f32 %v656, %v657
  %v659 = vsel %vm486, %v598, 0.0
  %v660 = vadd.f32 %v658, %v659
  %v661 = vsel %vm486, %v599, 0.0
  %v662 = vadd.f32 %v660, %v661
  %v663 = vsel %vm486, %v600, 0.0
  %v664 = vadd.f32 %v662, %v663
  %v665 = vsel %vm486, %v601, 0.0
  %v666 = vadd.f32 %v664, %v665
  %v667 = vsel %vm486, %v602, 0.0
  %v668 = vadd.f32 %v666, %v667
  %v669 = vsel %vm486, %v603, 0.0
  %v670 = vadd.f32 %v668, %v669
  %v671 = vsel %vm486, %v604, 0.0
  %v672 = vadd.f32 %v670, %v671
  %v673 = vsel %vm486, %v605, 0.0
  %v674 = vadd.f32 %v672, %v673
  %v675 = vsel %vm486, %v606, 0.0
  %v676 = vadd.f32 %v674, %v675
  %v677 = vsel %vm486, %v607, 0.0
  %v678 = vadd.f32 %v676, %v677
  %v679 = vsel %vm486, %v608, 0.0
  %v680 = vadd.f32 %v678, %v679
  %v681 = vsel %vm486, %v609, 0.0
  %v682 = vadd.f32 %v680, %v681
  %v683 = vsel %vm486, %v610, 0.0
  %v684 = vadd.f32 %v682, %v683
  %v685 = vsel %vm486, %v611, 0.0
  %v686 = vadd.f32 %v684, %v685
  %v687 = vsel %vm486, %v612, 0.0
  %v688 = vadd.f32 %v686, %v687
  %v689 = vsel %vm486, %v613, 0.0
  %v690 = vadd.f32 %v688, %v689
  %v691 = vsel %vm486, %v614, 0.0
  %v692 = vadd.f32 %v690, %v691
  %v693 = vsel %vm486, %v615, 0.0
  %v694 = vadd.f32 %v692, %v693
  %v695 = vsel %vm486, %v616, 0.0
  %v696 = vadd.f32 %v694, %v695
  %v697 = vsel %vm486, %v617, 0.0
  %v698 = vadd.f32 %v696, %v697
  %v699 = vsel %vm486, %v618, 0.0
  %v700 = vadd.f32 %v698, %v699
  %v701 = vsel %vm486, %v619, 0.0
  %v702 = vadd.f32 %v700, %v701
  %v703 = vsel %vm486, %v620, 0.0
  %v704 = vadd.f32 %v702, %v703
  %v705 = vsel %vm570, %v621, 0.0
  %v706 = vadd.f32 %v704, %v705
  %v707 = vrot.slane %v706, 4
  %v708 = vadd.f32 %v706, %v707
  %v709 = vrot.slane %v708, 2
  %v710 = vadd.f32 %v708, %v709
  %v711 = vrot.slane %v710, 1
  %v712 = vadd.f32 %v710, %v711
  %v713 = vmul.f32 %v578, 0.00295858
  %v714 = vmul.f32 %v712, 0.00295858
  %v715 = vmul.f32 %v713, %v713
  %v716 = vsub.f32 %v714, %v715
  %v717 = vadd.f32 %v716, 1e-05
  %v718 = vrsqrt.pop %v717
  %v719 = vld [vmem:[%s3] sm:$0x1]
  %v720 = vmul.f32 %v718, %v719
  %v721 = vsub.f32 %v273, %v713
  %v722 = vsub.f32 %v278, %v713
  %v723 = vsub.f32 %v283, %v713
  %v724 = vsub.f32 %v288, %v713
  %v725 = vsub.f32 %v293, %v713
  %v726 = vsub.f32 %v298, %v713
  %v727 = vsub.f32 %v303, %v713
  %v728 = vsub.f32 %v308, %v713
  %v729 = vsub.f32 %v313, %v713
  %v730 = vsub.f32 %v318, %v713
  %v731 = vsub.f32 %v323, %v713
  %v732 = vsub.f32 %v328, %v713
  %v733 = vsub.f32 %v333, %v713
  %v734 = vsub.f32 %v338, %v713
  %v735 = vsub.f32 %v343, %v713
  %v736 = vsub.f32 %v348, %v713
  %v737 = vsub.f32 %v353, %v713
  %v738 = vsub.f32 %v358, %v713
  %v739 = vsub.f32 %v363, %v713
  %v740 = vsub.f32 %v368, %v713
  %v741 = vsub.f32 %v373, %v713
  %v742 = vsub.f32 %v378, %v713
  %v743 = vsub.f32 %v383, %v713
  %v744 = vsub.f32 %v388, %v713
  %v745 = vsub.f32 %v393, %v713
  %v746 = vsub.f32 %v398, %v713
  %v747 = vsub.f32 %v403, %v713
  %v748 = vsub.f32 %v408, %v713
  %v749 = vsub.f32 %v413, %v713
  %v750 = vsub.f32 %v418, %v713
  %v751 = vsub.f32 %v423, %v713
  %v752 = vsub.f32 %v428, %v713
  %v753 = vsub.f32 %v433, %v713
  %v754 = vsub.f32 %v438, %v713
  %v755 = vsub.f32 %v443, %v713
  %v756 = vsub.f32 %v448, %v713
  %v757 = vsub.f32 %v453, %v713
  %v758 = vsub.f32 %v458, %v713
  %v759 = vsub.f32 %v463, %v713
  %v760 = vsub.f32 %v468, %v713
  %v761 = vsub.f32 %v473, %v713
  %v762 = vsub.f32 %v478, %v713
  %v763 = vsub.f32 %v483, %v713
  %v764 = vlaneseq
  %v765 = vshrl.u32 %v764, 7
  %v766 = vsub.s32 0, %v765
  %v767 = vrot.slane %v720, %v766
  %v768 = vmul.f32 %v721, %v767
  %v769 = vmul.f32 %v722, %v767
  %v770 = vmul.f32 %v723, %v767
  %v771 = vmul.f32 %v724, %v767
  %v772 = vmul.f32 %v725, %v767
  %v773 = vmul.f32 %v726, %v767
  %v774 = vmul.f32 %v727, %v767
  %v775 = vmul.f32 %v728, %v767
  %v776 = vmul.f32 %v729, %v767
  %v777 = vmul.f32 %v730, %v767
  %v778 = vmul.f32 %v731, %v767
  %v779 = vmul.f32 %v732, %v767
  %v780 = vmul.f32 %v733, %v767
  %v781 = vmul.f32 %v734, %v767
  %v782 = vmul.f32 %v735, %v767
  %v783 = vmul.f32 %v736, %v767
  %v784 = vmul.f32 %v737, %v767
  %v785 = vmul.f32 %v738, %v767
  %v786 = vmul.f32 %v739, %v767
  %v787 = vmul.f32 %v740, %v767
  %v788 = vmul.f32 %v741, %v767
  %v789 = vmul.f32 %v742, %v767
  %v790 = vmul.f32 %v743, %v767
  %v791 = vmul.f32 %v744, %v767
  %v792 = vmul.f32 %v745, %v767
  %v793 = vmul.f32 %v746, %v767
  %v794 = vmul.f32 %v747, %v767
  %v795 = vmul.f32 %v748, %v767
  %v796 = vmul.f32 %v749, %v767
  %v797 = vmul.f32 %v750, %v767
  %v798 = vmul.f32 %v751, %v767
  %v799 = vmul.f32 %v752, %v767
  %v800 = vmul.f32 %v753, %v767
  %v801 = vmul.f32 %v754, %v767
  %v802 = vmul.f32 %v755, %v767
  %v803 = vmul.f32 %v756, %v767
  %v804 = vmul.f32 %v757, %v767
  %v805 = vmul.f32 %v758, %v767
  %v806 = vmul.f32 %v759, %v767
  %v807 = vmul.f32 %v760, %v767
  %v808 = vmul.f32 %v761, %v767
  %v809 = vmul.f32 %v762, %v767
  %v810 = vmul.f32 %v763, %v767
  %v811 = vld [vmem:[%s4] sm:$0x1]
  %v813 = vlaneseq
  %v814 = vshrl.u32 %v813, 7
  %v815 = vsub.s32 0, %v814
  %v816 = vrot.slane %v811, %v815
  %v818 = vadd.f32 %v768, %v816
  %v819 = vadd.f32 %v769, %v816
  %v820 = vadd.f32 %v770, %v816
  %v821 = vadd.f32 %v771, %v816
  %v822 = vadd.f32 %v772, %v816
  %v823 = vadd.f32 %v773, %v816
  %v824 = vadd.f32 %v774, %v816
  %v825 = vadd.f32 %v775, %v816
  %v826 = vadd.f32 %v776, %v816
  %v827 = vadd.f32 %v777, %v816
  %v828 = vadd.f32 %v778, %v816
  %v829 = vadd.f32 %v779, %v816
  %v830 = vadd.f32 %v780, %v816
  %v831 = vadd.f32 %v781, %v816
  %v832 = vadd.f32 %v782, %v816
  %v833 = vadd.f32 %v783, %v816
  %v834 = vadd.f32 %v784, %v816
  %v835 = vadd.f32 %v785, %v816
  %v836 = vadd.f32 %v786, %v816
  %v837 = vadd.f32 %v787, %v816
  %v838 = vadd.f32 %v788, %v816
  %v839 = vadd.f32 %v789, %v816
  %v840 = vadd.f32 %v790, %v816
  %v841 = vadd.f32 %v791, %v816
  %v842 = vadd.f32 %v792, %v816
  %v843 = vadd.f32 %v793, %v816
  %v844 = vadd.f32 %v794, %v816
  %v845 = vadd.f32 %v795, %v816
  %v846 = vadd.f32 %v796, %v816
  %v847 = vadd.f32 %v797, %v816
  %v848 = vadd.f32 %v798, %v816
  %v849 = vadd.f32 %v799, %v816
  %v850 = vadd.f32 %v800, %v816
  %v851 = vadd.f32 %v801, %v816
  %v852 = vadd.f32 %v802, %v816
  %v853 = vadd.f32 %v803, %v816
  %v854 = vadd.f32 %v804, %v816
  %v855 = vadd.f32 %v805, %v816
  %v856 = vadd.f32 %v806, %v816
  %v857 = vadd.f32 %v807, %v816
  %v858 = vadd.f32 %v808, %v816
  %v859 = vadd.f32 %v809, %v816
  %v860 = vadd.f32 %v810, %v816
  %861 = vst.msk [vmem:[%s5] sm:$0xff] %vm486, %v818
  %862 = vst.msk [vmem:[%s5 + $0x8] sm:$0xff] %vm486, %v819
  %863 = vst.msk [vmem:[%s5 + $0x10] sm:$0xff] %vm486, %v820
  %864 = vst.msk [vmem:[%s5 + $0x18] sm:$0xff] %vm486, %v821
  %865 = vst.msk [vmem:[%s5 + $0x20] sm:$0xff] %vm486, %v822
  %866 = vst.msk [vmem:[%s5 + $0x28] sm:$0xff] %vm486, %v823
  %867 = vst.msk [vmem:[%s5 + $0x30] sm:$0xff] %vm486, %v824
  %868 = vst.msk [vmem:[%s5 + $0x38] sm:$0xff] %vm486, %v825
  %869 = vst.msk [vmem:[%s5 + $0x40] sm:$0xff] %vm486, %v826
  %870 = vst.msk [vmem:[%s5 + $0x48] sm:$0xff] %vm486, %v827
  %871 = vst.msk [vmem:[%s5 + $0x50] sm:$0xff] %vm486, %v828
  %872 = vst.msk [vmem:[%s5 + $0x58] sm:$0xff] %vm486, %v829
  %873 = vst.msk [vmem:[%s5 + $0x60] sm:$0xff] %vm486, %v830
  %874 = vst.msk [vmem:[%s5 + $0x68] sm:$0xff] %vm486, %v831
  %875 = vst.msk [vmem:[%s5 + $0x70] sm:$0xff] %vm486, %v832
  %876 = vst.msk [vmem:[%s5 + $0x78] sm:$0xff] %vm486, %v833
  %877 = vst.msk [vmem:[%s5 + $0x80] sm:$0xff] %vm486, %v834
  %878 = vst.msk [vmem:[%s5 + $0x88] sm:$0xff] %vm486, %v835
  %879 = vst.msk [vmem:[%s5 + $0x90] sm:$0xff] %vm486, %v836
  %880 = vst.msk [vmem:[%s5 + $0x98] sm:$0xff] %vm486, %v837
  %881 = vst.msk [vmem:[%s5 + $0xa0] sm:$0xff] %vm486, %v838
  %882 = vst.msk [vmem:[%s5 + $0xa8] sm:$0xff] %vm486, %v839
  %883 = vst.msk [vmem:[%s5 + $0xb0] sm:$0xff] %vm486, %v840
  %884 = vst.msk [vmem:[%s5 + $0xb8] sm:$0xff] %vm486, %v841
  %885 = vst.msk [vmem:[%s5 + $0xc0] sm:$0xff] %vm486, %v842
  %886 = vst.msk [vmem:[%s5 + $0xc8] sm:$0xff] %vm486, %v843
  %887 = vst.msk [vmem:[%s5 + $0xd0] sm:$0xff] %vm486, %v844
  %888 = vst.msk [vmem:[%s5 + $0xd8] sm:$0xff] %vm486, %v845
  %889 = vst.msk [vmem:[%s5 + $0xe0] sm:$0xff] %vm486, %v846
  %890 = vst.msk [vmem:[%s5 + $0xe8] sm:$0xff] %vm486, %v847
  %891 = vst.msk [vmem:[%s5 + $0xf0] sm:$0xff] %vm486, %v848
  %892 = vst.msk [vmem:[%s5 + $0xf8] sm:$0xff] %vm486, %v849
  %893 = vst.msk [vmem:[%s5 + $0x100] sm:$0xff] %vm486, %v850
  %894 = vst.msk [vmem:[%s5 + $0x108] sm:$0xff] %vm486, %v851
  %895 = vst.msk [vmem:[%s5 + $0x110] sm:$0xff] %vm486, %v852
  %896 = vst.msk [vmem:[%s5 + $0x118] sm:$0xff] %vm486, %v853
  %897 = vst.msk [vmem:[%s5 + $0x120] sm:$0xff] %vm486, %v854
  %898 = vst.msk [vmem:[%s5 + $0x128] sm:$0xff] %vm486, %v855
  %899 = vst.msk [vmem:[%s5 + $0x130] sm:$0xff] %vm486, %v856
  %900 = vst.msk [vmem:[%s5 + $0x138] sm:$0xff] %vm486, %v857
  %901 = vst.msk [vmem:[%s5 + $0x140] sm:$0xff] %vm486, %v858
  %902 = vst.msk [vmem:[%s5 + $0x148] sm:$0xff] %vm486, %v859
  %903 = vst.msk [vmem:[%s5 + $0x150] sm:$0x3] %vm570, %v860
  // Predicated region
  $region22: #{neural_net_forward.3} parent=0 // pred_check
    _
  $region23: #{neural_net_forward.3} parent=0 // pred_check_branch
    %905 = sbr.rel (0) target = $region25
  $region24: #{neural_net_forward.3} parent=0 // pred_region
    _
  $region25: #{neural_net_forward.3} parent=0 // pred_fallthru
    _
  // Predicated region
  $region26: #{neural_net_forward.3} parent=0 // pred_check
    _
  $region27: #{neural_net_forward.3} parent=0 // pred_check_branch
    %907 = sbr.rel (0) target = $region29
  $region28: #{neural_net_forward.3} parent=0 // pred_region
    _
  $region29: #{neural_net_forward.3} parent=0 // pred_fallthru
    _

// kernel: neural_net_forward.4
$region0: #{neural_net_forward.4}
  #allocation0 [shape = 'u32[]', space=smem, size = 0x4, offset = 0x4, fixed_abs, tag = 'smem constant byte address 0x4 - core index']
  #allocation1 [shape = 'u32[144,128]{1,0:T(1,128)}', space=vmem, size = 0x12000, scoped, tag = 'internal scratch']
  %s0 = inlined_call_operand.vmem [shape: f32[72,144], index: 0, kind: input, shape index: {}]
  %s1 = inlined_call_operand.vmem [shape: f32[144,32], index: 1, kind: input, shape index: {}]
  %s2 = inlined_call_operand.vmem [shape: f32[1,32], index: 2, kind: input, shape index: {}]
  %s3 = inlined_call_operand.vmem [shape: f32[1,32], index: 3, kind: input, shape index: {}]
  %s4 = inlined_call_operand.vmem [shape: f32[1,32], index: 4, kind: input, shape index: {}]
  %s5 = inlined_call_operand.vmem [shape: f32[72,32], index: 5, kind: output, shape index: {}]
  %s6 = sld [smem:[#allocation0]]
  $region30: #{neural_net_forward.4} parent=0
    _
  %s8 = ssub.s32 1, %s6
  %s9 = scalar_select 0, %s8, %s6
  // Predicated region
  $region2: #{neural_net_forward.4} parent=0 // pred_check
    _
  $region3: #{neural_net_forward.4} parent=0 // pred_check_branch
    %11 = sbr.rel (0) target = $region5
  $region4: #{neural_net_forward.4} parent=0 // pred_region
    _
  $region5: #{neural_net_forward.4} parent=0 // pred_fallthru
    _
  // Predicated region
  $region6: #{neural_net_forward.4} parent=0 // pred_check
    _
  $region7: #{neural_net_forward.4} parent=0 // pred_check_branch
    %13 = sbr.rel (0) target = $region9
  $region8: #{neural_net_forward.4} parent=0 // pred_region
    _
  $region9: #{neural_net_forward.4} parent=0 // pred_fallthru
    _
  // Predicated region
  $region10: #{neural_net_forward.4} parent=0 // pred_check
    _
  $region11: #{neural_net_forward.4} parent=0 // pred_check_branch
    %15 = sbr.rel (0) target = $region13
  $region12: #{neural_net_forward.4} parent=0 // pred_region
    _
  $region13: #{neural_net_forward.4} parent=0 // pred_fallthru
    _
  // Predicated region
  $region14: #{neural_net_forward.4} parent=0 // pred_check
    _
  $region15: #{neural_net_forward.4} parent=0 // pred_check_branch
    %17 = sbr.rel (0) target = $region17
  $region16: #{neural_net_forward.4} parent=0 // pred_region
    _
  $region17: #{neural_net_forward.4} parent=0 // pred_fallthru
    _
  // Predicated region
  $region18: #{neural_net_forward.4} parent=0 // pred_check
    _
  $region19: #{neural_net_forward.4} parent=0 // pred_check_branch
    %19 = sbr.rel (0) target = $region21
  $region20: #{neural_net_forward.4} parent=0 // pred_region
    _
  $region21: #{neural_net_forward.4} parent=0 // pred_fallthru
    _
  %v20 = vld [vmem:[%s0] sm:$0xff]
  %v21 = vld [vmem:[%s0 + $0x8] sm:$0xff]
  %v22 = vld [vmem:[%s0 + $0x10] sm:$0xff]
  %v23 = vld [vmem:[%s0 + $0x18] sm:$0xff]
  %v24 = vld [vmem:[%s0 + $0x20] sm:$0xff]
  %v25 = vld [vmem:[%s0 + $0x28] sm:$0xff]
  %v26 = vld [vmem:[%s0 + $0x30] sm:$0xff]
  %v27 = vld [vmem:[%s0 + $0x38] sm:$0xff]
  %v28 = vld [vmem:[%s0 + $0x40] sm:$0xff]
  %v29 = vld [vmem:[%s0 + $0x48] sm:$0xff]
  %v30 = vld [vmem:[%s0 + $0x50] sm:$0xff]
  %v31 = vld [vmem:[%s0 + $0x58] sm:$0xff]
  %v32 = vld [vmem:[%s0 + $0x60] sm:$0xff]
  %v33 = vld [vmem:[%s0 + $0x68] sm:$0xff]
  %v34 = vld [vmem:[%s0 + $0x70] sm:$0xff]
  %v35 = vld [vmem:[%s0 + $0x78] sm:$0xff]
  %v36 = vld [vmem:[%s0 + $0x80] sm:$0xff]
  %v37 = vld [vmem:[%s0 + $0x88] sm:$0xff]
  %v38 = vld [vmem:[%s1] sm:$0xff]
  %v39 = vld [vmem:[%s1 + $0x8] sm:$0xff]
  %v40 = vld [vmem:[%s1 + $0x10] sm:$0xff]
  %v41 = vld [vmem:[%s1 + $0x18] sm:$0xff]
  %v42 = vld [vmem:[%s1 + $0x20] sm:$0xff]
  %v43 = vld [vmem:[%s1 + $0x28] sm:$0xff]
  %v44 = vld [vmem:[%s1 + $0x30] sm:$0xff]
  %v45 = vld [vmem:[%s1 + $0x38] sm:$0xff]
  %v46 = vld [vmem:[%s1 + $0x40] sm:$0xff]
  %v47 = vld [vmem:[%s1 + $0x48] sm:$0xff]
  %v48 = vld [vmem:[%s1 + $0x50] sm:$0xff]
  %v49 = vld [vmem:[%s1 + $0x58] sm:$0xff]
  %v50 = vld [vmem:[%s1 + $0x60] sm:$0xff]
  %v51 = vld [vmem:[%s1 + $0x68] sm:$0xff]
  %v52 = vld [vmem:[%s1 + $0x70] sm:$0xff]
  %v53 = vld [vmem:[%s1 + $0x78] sm:$0xff]
  %v54 = vld [vmem:[%s1 + $0x80] sm:$0xff]
  %v55 = vld [vmem:[%s1 + $0x88] sm:$0xff]
  %v56 = vld [vmem:[%s2] sm:$0x1]
  %v58 = vlaneseq
  %v59 = vshrl.u32 %v58, 7
  %v60 = vsub.s32 0, %v59
  %v61 = vrot.slane %v56, %v60
  %vm63 = vcmask 130048
  %v65 = vsel %vm63, %v21, 0
  %v68 = vsel %vm63, %v23, 0
  %v71 = vsel %vm63, %v25, 0
  %v74 = vsel %vm63, %v27, 0
  %v77 = vsel %vm63, %v29, 0
  %v80 = vsel %vm63, %v31, 0
  %v83 = vsel %vm63, %v33, 0
  %v86 = vsel %vm63, %v35, 0
  %v89 = vsel %vm63, %v37, 0
  %91 = vmatprep.subr.mxu0 0.0
  %92 = vmatpush1.msra.mxu0 %v38
  %93 = vmatprep.subr.mxu0 0.0
  %94 = vmatpush1.msra.mxu0 %v39
  %95 = vmatprep.subr.mxu0 0.0
  %96 = vmatpush1.msra.mxu0 %v40
  %97 = vmatprep.subr.mxu0 0.0
  %98 = vmatpush1.msra.mxu0 %v41
  %99 = vmatprep.subr.mxu0 0.0
  %100 = vmatpush1.msra.mxu0 %v42
  %101 = vmatprep.subr.mxu0 0.0
  %102 = vmatpush1.msra.mxu0 %v43
  %103 = vmatprep.subr.mxu0 0.0
  %104 = vmatpush1.msra.mxu0 %v44
  %105 = vmatprep.subr.mxu0 0.0
  %106 = vmatpush1.msra.mxu0 %v45
  %107 = vmatprep.subr.mxu0 0.0
  %108 = vmatpush1.msra.mxu0 %v46
  %109 = vmatprep.subr.mxu0 0.0
  %110 = vmatpush1.msra.mxu0 %v47
  %111 = vmatprep.subr.mxu0 0.0
  %112 = vmatpush1.msra.mxu0 %v48
  %113 = vmatprep.subr.mxu0 0.0
  %114 = vmatpush1.msra.mxu0 %v49
  %115 = vmatprep.subr.mxu0 0.0
  %116 = vmatpush1.msra.mxu0 %v50
  %117 = vmatprep.subr.mxu0 0.0
  %118 = vmatpush1.msra.mxu0 %v51
  %119 = vmatprep.subr.mxu0 0.0
  %120 = vmatpush1.msra.mxu0 %v52
  %121 = vmatprep.subr.mxu0 0.0
  %122 = vmatpush1.msra.mxu0 %v53
  %123 = vmatprep.subr.mxu0 0.0
  %124 = vmatpush1.msra.mxu0 %v54
  %125 = vmatprep.subr.mxu0 0.0
  %126 = vmatpush1.msra.mxu0 %v55
  %127 = vmatprep.subr.mxu0 0.0
  %128 = vmatpush1.msra.mxu0 0.0
  %129 = vmatprep.subr.mxu0 0.0
  %130 = vmatpush1.msra.mxu0 0.0
  %131 = vmatprep.subr.mxu0 0.0
  %132 = vmatpush1.msra.mxu0 0.0
  %133 = vmatprep.subr.mxu0 0.0
  %134 = vmatpush1.msra.mxu0 0.0
  %135 = vmatprep.subr.mxu0 0.0
  %136 = vmatpush1.msra.mxu0 0.0
  %137 = vmatprep.subr.mxu0 0.0
  %138 = vmatpush1.msra.mxu0 0.0
  %139 = vmatprep.subr.mxu0 0.0
  %140 = vmatpush1.msra.mxu0 0.0
  %141 = vmatprep.subr.mxu0 0.0
  %142 = vmatpush1.msra.mxu0 0.0
  %143 = vmatprep.subr.mxu0 0.0
  %144 = vmatpush1.msra.mxu0 0.0
  %145 = vmatprep.subr.mxu0 0.0
  %146 = vmatpush1.msra.mxu0 0.0
  %147 = vmatprep.subr.mxu0 0.0
  %148 = vmatpush1.msra.mxu0 0.0
  %149 = vmatprep.subr.mxu0 0.0
  %150 = vmatpush1.msra.mxu0 0.0
  %151 = vmatprep.subr.mxu0 0.0
  %152 = vmatpush1.msra.mxu0 0.0
  %153 = vmatprep.subr.mxu0 0.0
  %154 = vmatpush1.msra.mxu0 0.0
  %155 = vmatprep.mubr.f32.mxu0 %v65
  %156 = vmatmul.mubr.f32.gmra.mrb[0].mxu0 %v20
  %v157 = vpop.f32.mrb[0].mxu0
  %v158 = vadd.f32 %v61, %v157
  %v159 = vpop.f32.mrb[0].mxu0
  %160 = vmatprep.mubr.f32.mxu0 %v68
  %161 = vmatmul.mubr.f32.gmra.mrb[0].mxu0 %v22
  %v162 = vpop.f32.mrb[0].mxu0
  %v163 = vadd.f32 %v61, %v162
  %v164 = vpop.f32.mrb[0].mxu0
  %165 = vmatprep.mubr.f32.mxu0 %v71
  %166 = vmatmul.mubr.f32.gmra.mrb[0].mxu0 %v24
  %v167 = vpop.f32.mrb[0].mxu0
  %v168 = vadd.f32 %v61, %v167
  %v169 = vpop.f32.mrb[0].mxu0
  %170 = vmatprep.mubr.f32.mxu0 %v74
  %171 = vmatmul.mubr.f32.gmra.mrb[0].mxu0 %v26
  %v172 = vpop.f32.mrb[0].mxu0
  %v173 = vadd.f32 %v61, %v172
  %v174 = vpop.f32.mrb[0].mxu0
  %175 = vmatprep.mubr.f32.mxu0 %v77
  %176 = vmatmul.mubr.f32.gmra.mrb[0].mxu0 %v28
  %v177 = vpop.f32.mrb[0].mxu0
  %v178 = vadd.f32 %v61, %v177
  %v179 = vpop.f32.mrb[0].mxu0
  %180 = vmatprep.mubr.f32.mxu0 %v80
  %181 = vmatmul.mubr.f32.gmra.mrb[0].mxu0 %v30
  %v182 = vpop.f32.mrb[0].mxu0
  %v183 = vadd.f32 %v61, %v182
  %v184 = vpop.f32.mrb[0].mxu0
  %185 = vmatprep.mubr.f32.mxu0 %v83
  %186 = vmatmul.mubr.f32.gmra.mrb[0].mxu0 %v32
  %v187 = vpop.f32.mrb[0].mxu0
  %v188 = vadd.f32 %v61, %v187
  %v189 = vpop.f32.mrb[0].mxu0
  %190 = vmatprep.mubr.f32.mxu0 %v86
  %191 = vmatmul.mubr.f32.gmra.mrb[0].mxu0 %v34
  %v192 = vpop.f32.mrb[0].mxu0
  %v193 = vadd.f32 %v61, %v192
  %v194 = vpop.f32.mrb[0].mxu0
  %195 = vmatprep.mubr.f32.mxu0 %v89
  %196 = vmatmul.mubr.f32.gmra.mrb[0].mxu0 %v36
  %v197 = vpop.f32.mrb[0].mxu0
  %v198 = vadd.f32 %v61, %v197
  %v199 = vpop.f32.mrb[0].mxu0
  %200 = vdwg.mxu0
  %vm201 = vcmask 261120
  %v202 = vsel %vm201, %v158, 0.0
  %v203 = vsel %vm201, %v163, 0.0
  %v204 = vadd.f32 %v202, %v203
  %v205 = vsel %vm201, %v168, 0.0
  %v206 = vadd.f32 %v204, %v205
  %v207 = vsel %vm201, %v173, 0.0
  %v208 = vadd.f32 %v206, %v207
  %v209 = vsel %vm201, %v178, 0.0
  %v210 = vadd.f32 %v208, %v209
  %v211 = vsel %vm201, %v183, 0.0
  %v212 = vadd.f32 %v210, %v211
  %v213 = vsel %vm201, %v188, 0.0
  %v214 = vadd.f32 %v212, %v213
  %v215 = vsel %vm201, %v193, 0.0
  %v216 = vadd.f32 %v214, %v215
  %v217 = vsel %vm201, %v198, 0.0
  %v218 = vadd.f32 %v216, %v217
  %v219 = vrot.slane %v218, 4
  %v220 = vadd.f32 %v218, %v219
  %v221 = vrot.slane %v220, 2
  %v222 = vadd.f32 %v220, %v221
  %v223 = vrot.slane %v222, 1
  %v224 = vadd.f32 %v222, %v223
  %v225 = vmul.f32 %v158, %v158
  %v226 = vmul.f32 %v163, %v163
  %v227 = vmul.f32 %v168, %v168
  %v228 = vmul.f32 %v173, %v173
  %v229 = vmul.f32 %v178, %v178
  %v230 = vmul.f32 %v183, %v183
  %v231 = vmul.f32 %v188, %v188
  %v232 = vmul.f32 %v193, %v193
  %v233 = vmul.f32 %v198, %v198
  %v234 = vsel %vm201, %v225, 0.0
  %v235 = vsel %vm201, %v226, 0.0
  %v236 = vadd.f32 %v234, %v235
  %v237 = vsel %vm201, %v227, 0.0
  %v238 = vadd.f32 %v236, %v237
  %v239 = vsel %vm201, %v228, 0.0
  %v240 = vadd.f32 %v238, %v239
  %v241 = vsel %vm201, %v229, 0.0
  %v242 = vadd.f32 %v240, %v241
  %v243 = vsel %vm201, %v230, 0.0
  %v244 = vadd.f32 %v242, %v243
  %v245 = vsel %vm201, %v231, 0.0
  %v246 = vadd.f32 %v244, %v245
  %v247 = vsel %vm201, %v232, 0.0
  %v248 = vadd.f32 %v246, %v247
  %v249 = vsel %vm201, %v233, 0.0
  %v250 = vadd.f32 %v248, %v249
  %v251 = vrot.slane %v250, 4
  %v252 = vadd.f32 %v250, %v251
  %v253 = vrot.slane %v252, 2
  %v254 = vadd.f32 %v252, %v253
  %v255 = vrot.slane %v254, 1
  %v256 = vadd.f32 %v254, %v255
  %v257 = vmul.f32 %v224, 0.013888889
  %v258 = vmul.f32 %v256, 0.013888889
  %v259 = vmul.f32 %v257, %v257
  %v260 = vsub.f32 %v258, %v259
  %v261 = vadd.f32 %v260, 1e-05
  %v262 = vrsqrt.pop %v261
  %v263 = vld [vmem:[%s3] sm:$0x1]
  %v264 = vmul.f32 %v262, %v263
  %v265 = vsub.f32 %v158, %v257
  %v266 = vsub.f32 %v163, %v257
  %v267 = vsub.f32 %v168, %v257
  %v268 = vsub.f32 %v173, %v257
  %v269 = vsub.f32 %v178, %v257
  %v270 = vsub.f32 %v183, %v257
  %v271 = vsub.f32 %v188, %v257
  %v272 = vsub.f32 %v193, %v257
  %v273 = vsub.f32 %v198, %v257
  %v274 = vlaneseq
  %v275 = vshrl.u32 %v274, 7
  %v276 = vsub.s32 0, %v275
  %v277 = vrot.slane %v264, %v276
  %v278 = vmul.f32 %v265, %v277
  %v279 = vmul.f32 %v266, %v277
  %v280 = vmul.f32 %v267, %v277
  %v281 = vmul.f32 %v268, %v277
  %v282 = vmul.f32 %v269, %v277
  %v283 = vmul.f32 %v270, %v277
  %v284 = vmul.f32 %v271, %v277
  %v285 = vmul.f32 %v272, %v277
  %v286 = vmul.f32 %v273, %v277
  %v287 = vld [vmem:[%s4] sm:$0x1]
  %v289 = vlaneseq
  %v290 = vshrl.u32 %v289, 7
  %v291 = vsub.s32 0, %v290
  %v292 = vrot.slane %v287, %v291
  %v294 = vadd.f32 %v278, %v292
  %v295 = vadd.f32 %v279, %v292
  %v296 = vadd.f32 %v280, %v292
  %v297 = vadd.f32 %v281, %v292
  %v298 = vadd.f32 %v282, %v292
  %v299 = vadd.f32 %v283, %v292
  %v300 = vadd.f32 %v284, %v292
  %v301 = vadd.f32 %v285, %v292
  %v302 = vadd.f32 %v286, %v292
  %303 = vst.msk [vmem:[%s5] sm:$0xff] %vm201, %v294
  %304 = vst.msk [vmem:[%s5 + $0x8] sm:$0xff] %vm201, %v295
  %305 = vst.msk [vmem:[%s5 + $0x10] sm:$0xff] %vm201, %v296
  %306 = vst.msk [vmem:[%s5 + $0x18] sm:$0xff] %vm201, %v297
  %307 = vst.msk [vmem:[%s5 + $0x20] sm:$0xff] %vm201, %v298
  %308 = vst.msk [vmem:[%s5 + $0x28] sm:$0xff] %vm201, %v299
  %309 = vst.msk [vmem:[%s5 + $0x30] sm:$0xff] %vm201, %v300
  %310 = vst.msk [vmem:[%s5 + $0x38] sm:$0xff] %vm201, %v301
  %311 = vst.msk [vmem:[%s5 + $0x40] sm:$0xff] %vm201, %v302
  // Predicated region
  $region22: #{neural_net_forward.4} parent=0 // pred_check
    _
  $region23: #{neural_net_forward.4} parent=0 // pred_check_branch
    %313 = sbr.rel (0) target = $region25
  $region24: #{neural_net_forward.4} parent=0 // pred_region
    _
  $region25: #{neural_net_forward.4} parent=0 // pred_fallthru
    _
  // Predicated region
  $region26: #{neural_net_forward.4} parent=0 // pred_check
    _
  $region27: #{neural_net_forward.4} parent=0 // pred_check_branch
    %315 = sbr.rel (0) target = $region29
  $region28: #{neural_net_forward.4} parent=0 // pred_region
    _
  $region29: #{neural_net_forward.4} parent=0 // pred_fallthru
    _

// kernel: neural_net_forward.5
$region0: #{neural_net_forward.5}
  #allocation0 [shape = 'u32[]', space=smem, size = 0x4, offset = 0x4, fixed_abs, tag = 'smem constant byte address 0x4 - core index']
  #allocation1 [shape = 'u32[144,128]{1,0:T(1,128)}', space=vmem, size = 0x12000, scoped, tag = 'internal scratch']
  %s0 = inlined_call_operand.vmem [shape: f32[2,1152], index: 0, kind: input, shape index: {}]
  %s1 = inlined_call_operand.vmem [shape: f32[1152,128], index: 1, kind: input, shape index: {}]
  %s2 = inlined_call_operand.vmem [shape: f32[1,128], index: 2, kind: input, shape index: {}]
  %s3 = inlined_call_operand.vmem [shape: f32[128,10], index: 3, kind: input, shape index: {}]
  %s4 = inlined_call_operand.vmem [shape: f32[1,10], index: 4, kind: input, shape index: {}]
  %s5 = inlined_call_operand.hbm [shape: f32[2,10], index: 5, kind: output, shape index: {}]
  %s6 = sld [smem:[#allocation0]]
  $region30: #{neural_net_forward.5} parent=0
    _
  %s8 = ssub.s32 1, %s6
  %s9 = scalar_select 0, %s8, %s6
  $region1: #{neural_net_forward.5} parent=0
    #allocation2 [shape = 'u8[1024]{0}', space=vmem, size = 0x400, scoped, tag = 'output window, operand 0, single buffered']
    #allocation3 [shape = 's32[1]{0}', space=sflag, size = 0x4, scoped, tag = 'scoped memory for neural_net_forward.5']
    %10 = vsyncpa [#allocation3], 0
    // Predicated region
    $region2: #{neural_net_forward.5} parent=1 // pred_check
      _
    $region3: #{neural_net_forward.5} parent=1 // pred_check_branch
      %12 = sbr.rel (0) target = $region5
    $region4: #{neural_net_forward.5} parent=1 // pred_region
      _
    $region5: #{neural_net_forward.5} parent=1 // pred_fallthru
      _
    // Predicated region
    $region6: #{neural_net_forward.5} parent=1 // pred_check
      _
    $region7: #{neural_net_forward.5} parent=1 // pred_check_branch
      %14 = sbr.rel (0) target = $region9
    $region8: #{neural_net_forward.5} parent=1 // pred_region
      _
    $region9: #{neural_net_forward.5} parent=1 // pred_fallthru
      _
    // Predicated region
    $region10: #{neural_net_forward.5} parent=1 // pred_check
      _
    $region11: #{neural_net_forward.5} parent=1 // pred_check_branch
      %16 = sbr.rel (0) target = $region13
    $region12: #{neural_net_forward.5} parent=1 // pred_region
      _
    $region13: #{neural_net_forward.5} parent=1 // pred_fallthru
      _
    // Predicated region
    $region14: #{neural_net_forward.5} parent=1 // pred_check
      _
    $region15: #{neural_net_forward.5} parent=1 // pred_check_branch
      %18 = sbr.rel (0) target = $region17
    $region16: #{neural_net_forward.5} parent=1 // pred_region
      _
    $region17: #{neural_net_forward.5} parent=1 // pred_fallthru
      _
    // Predicated region
    $region18: #{neural_net_forward.5} parent=1 // pred_check
      _
    $region19: #{neural_net_forward.5} parent=1 // pred_check_branch
      %20 = sbr.rel (0) target = $region21
    $region20: #{neural_net_forward.5} parent=1 // pred_region
      _
    $region21: #{neural_net_forward.5} parent=1 // pred_fallthru
      _
    %v21 = vld [vmem:[%s0] sm:$0xff]
    %v22 = vld [vmem:[%s0 + $0x8] sm:$0xff]
    %v23 = vld [vmem:[%s0 + $0x10] sm:$0x3]
    %v24 = vld [vmem:[%s1] sm:$0xff]
    %v25 = vld [vmem:[%s1 + $0x8] sm:$0xff]
    %v26 = vld [vmem:[%s1 + $0x10] sm:$0xff]
    %v27 = vld [vmem:[%s1 + $0x18] sm:$0xff]
    %v28 = vld [vmem:[%s1 + $0x20] sm:$0xff]
    %v29 = vld [vmem:[%s1 + $0x28] sm:$0xff]
    %v30 = vld [vmem:[%s1 + $0x30] sm:$0xff]
    %v31 = vld [vmem:[%s1 + $0x38] sm:$0xff]
    %v32 = vld [vmem:[%s1 + $0x40] sm:$0xff]
    %v33 = vld [vmem:[%s1 + $0x48] sm:$0xff]
    %v34 = vld [vmem:[%s1 + $0x50] sm:$0xff]
    %v35 = vld [vmem:[%s1 + $0x58] sm:$0xff]
    %v36 = vld [vmem:[%s1 + $0x60] sm:$0xff]
    %v37 = vld [vmem:[%s1 + $0x68] sm:$0xff]
    %v38 = vld [vmem:[%s1 + $0x70] sm:$0xff]
    %v39 = vld [vmem:[%s1 + $0x78] sm:$0xff]
    %v40 = vld [vmem:[%s1 + $0x80] sm:$0xff]
    %v41 = vld [vmem:[%s1 + $0x88] sm:$0xff]
    %v42 = vld [vmem:[%s1 + $0x90] sm:$0xff]
    %v43 = vld [vmem:[%s1 + $0x98] sm:$0xff]
    %v44 = vld [vmem:[%s1 + $0xa0] sm:$0xff]
    %v45 = vld [vmem:[%s1 + $0xa8] sm:$0xff]
    %v46 = vld [vmem:[%s1 + $0xb0] sm:$0xff]
    %v47 = vld [vmem:[%s1 + $0xb8] sm:$0xff]
    %v48 = vld [vmem:[%s1 + $0xc0] sm:$0xff]
    %v49 = vld [vmem:[%s1 + $0xc8] sm:$0xff]
    %v50 = vld [vmem:[%s1 + $0xd0] sm:$0xff]
    %v51 = vld [vmem:[%s1 + $0xd8] sm:$0xff]
    %v52 = vld [vmem:[%s1 + $0xe0] sm:$0xff]
    %v53 = vld [vmem:[%s1 + $0xe8] sm:$0xff]
    %v54 = vld [vmem:[%s1 + $0xf0] sm:$0xff]
    %v55 = vld [vmem:[%s1 + $0xf8] sm:$0xff]
    %v56 = vld [vmem:[%s1 + $0x100] sm:$0xff]
    %v57 = vld [vmem:[%s1 + $0x108] sm:$0xff]
    %v58 = vld [vmem:[%s1 + $0x110] sm:$0xff]
    %v59 = vld [vmem:[%s1 + $0x118] sm:$0xff]
    %v60 = vld [vmem:[%s1 + $0x120] sm:$0xff]
    %v61 = vld [vmem:[%s1 + $0x128] sm:$0xff]
    %v62 = vld [vmem:[%s1 + $0x130] sm:$0xff]
    %v63 = vld [vmem:[%s1 + $0x138] sm:$0xff]
    %v64 = vld [vmem:[%s1 + $0x140] sm:$0xff]
    %v65 = vld [vmem:[%s1 + $0x148] sm:$0xff]
    %v66 = vld [vmem:[%s1 + $0x150] sm:$0xff]
    %v67 = vld [vmem:[%s1 + $0x158] sm:$0xff]
    %v68 = vld [vmem:[%s1 + $0x160] sm:$0xff]
    %v69 = vld [vmem:[%s1 + $0x168] sm:$0xff]
    %v70 = vld [vmem:[%s1 + $0x170] sm:$0xff]
    %v71 = vld [vmem:[%s1 + $0x178] sm:$0xff]
    %v72 = vld [vmem:[%s1 + $0x180] sm:$0xff]
    %v73 = vld [vmem:[%s1 + $0x188] sm:$0xff]
    %v74 = vld [vmem:[%s1 + $0x190] sm:$0xff]
    %v75 = vld [vmem:[%s1 + $0x198] sm:$0xff]
    %v76 = vld [vmem:[%s1 + $0x1a0] sm:$0xff]
    %v77 = vld [vmem:[%s1 + $0x1a8] sm:$0xff]
    %v78 = vld [vmem:[%s1 + $0x1b0] sm:$0xff]
    %v79 = vld [vmem:[%s1 + $0x1b8] sm:$0xff]
    %v80 = vld [vmem:[%s1 + $0x1c0] sm:$0xff]
    %v81 = vld [vmem:[%s1 + $0x1c8] sm:$0xff]
    %v82 = vld [vmem:[%s1 + $0x1d0] sm:$0xff]
    %v83 = vld [vmem:[%s1 + $0x1d8] sm:$0xff]
    %v84 = vld [vmem:[%s1 + $0x1e0] sm:$0xff]
    %v85 = vld [vmem:[%s1 + $0x1e8] sm:$0xff]
    %v86 = vld [vmem:[%s1 + $0x1f0] sm:$0xff]
    %v87 = vld [vmem:[%s1 + $0x1f8] sm:$0xff]
    %v88 = vld [vmem:[%s1 + $0x200] sm:$0xff]
    %v89 = vld [vmem:[%s1 + $0x208] sm:$0xff]
    %v90 = vld [vmem:[%s1 + $0x210] sm:$0xff]
    %v91 = vld [vmem:[%s1 + $0x218] sm:$0xff]
    %v92 = vld [vmem:[%s1 + $0x220] sm:$0xff]
    %v93 = vld [vmem:[%s1 + $0x228] sm:$0xff]
    %v94 = vld [vmem:[%s1 + $0x230] sm:$0xff]
    %v95 = vld [vmem:[%s1 + $0x238] sm:$0xff]
    %v96 = vld [vmem:[%s1 + $0x240] sm:$0xff]
    %v97 = vld [vmem:[%s1 + $0x248] sm:$0xff]
    %v98 = vld [vmem:[%s1 + $0x250] sm:$0xff]
    %v99 = vld [vmem:[%s1 + $0x258] sm:$0xff]
    %v100 = vld [vmem:[%s1 + $0x260] sm:$0xff]
    %v101 = vld [vmem:[%s1 + $0x268] sm:$0xff]
    %v102 = vld [vmem:[%s1 + $0x270] sm:$0xff]
    %v103 = vld [vmem:[%s1 + $0x278] sm:$0xff]
    %v104 = vld [vmem:[%s1 + $0x280] sm:$0xff]
    %v105 = vld [vmem:[%s1 + $0x288] sm:$0xff]
    %v106 = vld [vmem:[%s1 + $0x290] sm:$0xff]
    %v107 = vld [vmem:[%s1 + $0x298] sm:$0xff]
    %v108 = vld [vmem:[%s1 + $0x2a0] sm:$0xff]
    %v109 = vld [vmem:[%s1 + $0x2a8] sm:$0xff]
    %v110 = vld [vmem:[%s1 + $0x2b0] sm:$0xff]
    %v111 = vld [vmem:[%s1 + $0x2b8] sm:$0xff]
    %v112 = vld [vmem:[%s1 + $0x2c0] sm:$0xff]
    %v113 = vld [vmem:[%s1 + $0x2c8] sm:$0xff]
    %v114 = vld [vmem:[%s1 + $0x2d0] sm:$0xff]
    %v115 = vld [vmem:[%s1 + $0x2d8] sm:$0xff]
    %v116 = vld [vmem:[%s1 + $0x2e0] sm:$0xff]
    %v117 = vld [vmem:[%s1 + $0x2e8] sm:$0xff]
    %v118 = vld [vmem:[%s1 + $0x2f0] sm:$0xff]
    %v119 = vld [vmem:[%s1 + $0x2f8] sm:$0xff]
    %v120 = vld [vmem:[%s1 + $0x300] sm:$0xff]
    %v121 = vld [vmem:[%s1 + $0x308] sm:$0xff]
    %v122 = vld [vmem:[%s1 + $0x310] sm:$0xff]
    %v123 = vld [vmem:[%s1 + $0x318] sm:$0xff]
    %v124 = vld [vmem:[%s1 + $0x320] sm:$0xff]
    %v125 = vld [vmem:[%s1 + $0x328] sm:$0xff]
    %v126 = vld [vmem:[%s1 + $0x330] sm:$0xff]
    %v127 = vld [vmem:[%s1 + $0x338] sm:$0xff]
    %v128 = vld [vmem:[%s1 + $0x340] sm:$0xff]
    %v129 = vld [vmem:[%s1 + $0x348] sm:$0xff]
    %v130 = vld [vmem:[%s1 + $0x350] sm:$0xff]
    %v131 = vld [vmem:[%s1 + $0x358] sm:$0xff]
    %v132 = vld [vmem:[%s1 + $0x360] sm:$0xff]
    %v133 = vld [vmem:[%s1 + $0x368] sm:$0xff]
    %v134 = vld [vmem:[%s1 + $0x370] sm:$0xff]
    %v135 = vld [vmem:[%s1 + $0x378] sm:$0xff]
    %v136 = vld [vmem:[%s1 + $0x380] sm:$0xff]
    %v137 = vld [vmem:[%s1 + $0x388] sm:$0xff]
    %v138 = vld [vmem:[%s1 + $0x390] sm:$0xff]
    %v139 = vld [vmem:[%s1 + $0x398] sm:$0xff]
    %v140 = vld [vmem:[%s1 + $0x3a0] sm:$0xff]
    %v141 = vld [vmem:[%s1 + $0x3a8] sm:$0xff]
    %v142 = vld [vmem:[%s1 + $0x3b0] sm:$0xff]
    %v143 = vld [vmem:[%s1 + $0x3b8] sm:$0xff]
    %v144 = vld [vmem:[%s1 + $0x3c0] sm:$0xff]
    %v145 = vld [vmem:[%s1 + $0x3c8] sm:$0xff]
    %v146 = vld [vmem:[%s1 + $0x3d0] sm:$0xff]
    %v147 = vld [vmem:[%s1 + $0x3d8] sm:$0xff]
    %v148 = vld [vmem:[%s1 + $0x3e0] sm:$0xff]
    %v149 = vld [vmem:[%s1 + $0x3e8] sm:$0xff]
    %v150 = vld [vmem:[%s1 + $0x3f0] sm:$0xff]
    %v151 = vld [vmem:[%s1 + $0x3f8] sm:$0xff]
    %v152 = vld [vmem:[%s1 + $0x400] sm:$0xff]
    %v153 = vld [vmem:[%s1 + $0x408] sm:$0xff]
    %v154 = vld [vmem:[%s1 + $0x410] sm:$0xff]
    %v155 = vld [vmem:[%s1 + $0x418] sm:$0xff]
    %v156 = vld [vmem:[%s1 + $0x420] sm:$0xff]
    %v157 = vld [vmem:[%s1 + $0x428] sm:$0xff]
    %v158 = vld [vmem:[%s1 + $0x430] sm:$0xff]
    %v159 = vld [vmem:[%s1 + $0x438] sm:$0xff]
    %v160 = vld [vmem:[%s1 + $0x440] sm:$0xff]
    %v161 = vld [vmem:[%s1 + $0x448] sm:$0xff]
    %v162 = vld [vmem:[%s1 + $0x450] sm:$0xff]
    %v163 = vld [vmem:[%s1 + $0x458] sm:$0xff]
    %v164 = vld [vmem:[%s1 + $0x460] sm:$0xff]
    %v165 = vld [vmem:[%s1 + $0x468] sm:$0xff]
    %v166 = vld [vmem:[%s1 + $0x470] sm:$0xff]
    %v167 = vld [vmem:[%s1 + $0x478] sm:$0xff]
    %v168 = vld [vmem:[%s2] sm:$0x1]
    %v170 = vlaneseq
    %v171 = vshrl.u32 %v170, 7
    %v172 = vsub.s32 0, %v171
    %v173 = vrot.slane %v168, %v172
    %v178 = vcombine.high %v21, %v21
    %v180 = vunpack.c.l.s4 1983009808
    %v181 = vunpack.c.0.s8 %v180
    %v182 = vlaneseq
    %v183 = vshrl.u32 %v182, 7
    %v184 = vsub.s32 %v181, %v183
    %v185 = vrot.slane %v21, %v184
    %v187 = vunpack.c.l.s4 1983009808
    %v188 = vunpack.c.0.s8 %v187
    %v189 = vlaneseq
    %v190 = vshrl.u32 %v189, 7
    %v191 = vsub.s32 %v188, %v190
    %v192 = vrot.slane %v178, %v191
    %v193 = vcombine.high %v185, %v185
    %v194 = vcombine.high %v192, %v192
    %v195 = vcombine.high %v22, %v22
    %v197 = vunpack.c.l.s4 1983009808
    %v198 = vunpack.c.0.s8 %v197
    %v199 = vlaneseq
    %v200 = vshrl.u32 %v199, 7
    %v201 = vsub.s32 %v198, %v200
    %v202 = vrot.slane %v22, %v201
    %v204 = vunpack.c.l.s4 1983009808
    %v205 = vunpack.c.0.s8 %v204
    %v206 = vlaneseq
    %v207 = vshrl.u32 %v206, 7
    %v208 = vsub.s32 %v205, %v207
    %v209 = vrot.slane %v195, %v208
    %v210 = vcombine.high %v202, %v202
    %v211 = vcombine.high %v209, %v209
    %v213 = vunpack.c.l.s4 1983009808
    %v214 = vunpack.c.0.s8 %v213
    %v215 = vlaneseq
    %v216 = vshrl.u32 %v215, 7
    %v217 = vsub.s32 %v214, %v216
    %v218 = vrot.slane %v23, %v217
    %228 = vmatprep.subr.mxu0 0.0
    %229 = vmatpush1.msra.mxu0 %v24
    %230 = vmatprep.subr.mxu0 0.0
    %231 = vmatpush1.msra.mxu0 %v25
    %232 = vmatprep.subr.mxu0 0.0
    %233 = vmatpush1.msra.mxu0 %v26
    %234 = vmatprep.subr.mxu0 0.0
    %235 = vmatpush1.msra.mxu0 %v27
    %236 = vmatprep.subr.mxu0 0.0
    %237 = vmatpush1.msra.mxu0 %v28
    %238 = vmatprep.subr.mxu0 0.0
    %239 = vmatpush1.msra.mxu0 %v29
    %240 = vmatprep.subr.mxu0 0.0
    %241 = vmatpush1.msra.mxu0 %v30
    %242 = vmatprep.subr.mxu0 0.0
    %243 = vmatpush1.msra.mxu0 %v31
    %244 = vmatprep.subr.mxu0 0.0
    %245 = vmatpush1.msra.mxu0 %v32
    %246 = vmatprep.subr.mxu0 0.0
    %247 = vmatpush1.msra.mxu0 %v33
    %248 = vmatprep.subr.mxu0 0.0
    %249 = vmatpush1.msra.mxu0 %v34
    %250 = vmatprep.subr.mxu0 0.0
    %251 = vmatpush1.msra.mxu0 %v35
    %252 = vmatprep.subr.mxu0 0.0
    %253 = vmatpush1.msra.mxu0 %v36
    %254 = vmatprep.subr.mxu0 0.0
    %255 = vmatpush1.msra.mxu0 %v37
    %256 = vmatprep.subr.mxu0 0.0
    %257 = vmatpush1.msra.mxu0 %v38
    %258 = vmatprep.subr.mxu0 0.0
    %259 = vmatpush1.msra.mxu0 %v39
    %260 = vmatprep.subr.mxu0 0.0
    %261 = vmatpush1.msra.mxu0 %v40
    %262 = vmatprep.subr.mxu0 0.0
    %263 = vmatpush1.msra.mxu0 %v41
    %264 = vmatprep.subr.mxu0 0.0
    %265 = vmatpush1.msra.mxu0 %v42
    %266 = vmatprep.subr.mxu0 0.0
    %267 = vmatpush1.msra.mxu0 %v43
    %268 = vmatprep.subr.mxu0 0.0
    %269 = vmatpush1.msra.mxu0 %v44
    %270 = vmatprep.subr.mxu0 0.0
    %271 = vmatpush1.msra.mxu0 %v45
    %272 = vmatprep.subr.mxu0 0.0
    %273 = vmatpush1.msra.mxu0 %v46
    %274 = vmatprep.subr.mxu0 0.0
    %275 = vmatpush1.msra.mxu0 %v47
    %276 = vmatprep.subr.mxu0 0.0
    %277 = vmatpush1.msra.mxu0 %v48
    %278 = vmatprep.subr.mxu0 0.0
    %279 = vmatpush1.msra.mxu0 %v49
    %280 = vmatprep.subr.mxu0 0.0
    %281 = vmatpush1.msra.mxu0 %v50
    %282 = vmatprep.subr.mxu0 0.0
    %283 = vmatpush1.msra.mxu0 %v51
    %284 = vmatprep.subr.mxu0 0.0
    %285 = vmatpush1.msra.mxu0 %v52
    %286 = vmatprep.subr.mxu0 0.0
    %287 = vmatpush1.msra.mxu0 %v53
    %288 = vmatprep.subr.mxu0 0.0
    %289 = vmatpush1.msra.mxu0 %v54
    %290 = vmatprep.subr.mxu0 0.0
    %291 = vmatpush1.msra.mxu0 %v55
    %292 = vmatprep.mubr.f32.mxu0 %v193
    %293 = vmatmul.mubr.f32.gmra.mrb[0].mxu0 %v185
    %v294 = vpop.f32.mrb[0].mxu0
    %v295 = vadd.f32 %v173, %v294
    %v296 = vpop.f32.mrb[0].mxu0
    %297 = vdwg.mxu0
    %298 = vmatprep.subr.mxu0 0.0
    %299 = vmatpush1.msra.mxu0 %v56
    %300 = vmatprep.subr.mxu0 0.0
    %301 = vmatpush1.msra.mxu0 %v57
    %302 = vmatprep.subr.mxu0 0.0
    %303 = vmatpush1.msra.mxu0 %v58
    %304 = vmatprep.subr.mxu0 0.0
    %305 = vmatpush1.msra.mxu0 %v59
    %306 = vmatprep.subr.mxu0 0.0
    %307 = vmatpush1.msra.mxu0 %v60
    %308 = vmatprep.subr.mxu0 0.0
    %309 = vmatpush1.msra.mxu0 %v61
    %310 = vmatprep.subr.mxu0 0.0
    %311 = vmatpush1.msra.mxu0 %v62
    %312 = vmatprep.subr.mxu0 0.0
    %313 = vmatpush1.msra.mxu0 %v63
    %314 = vmatprep.subr.mxu0 0.0
    %315 = vmatpush1.msra.mxu0 %v64
    %316 = vmatprep.subr.mxu0 0.0
    %317 = vmatpush1.msra.mxu0 %v65
    %318 = vmatprep.subr.mxu0 0.0
    %319 = vmatpush1.msra.mxu0 %v66
    %320 = vmatprep.subr.mxu0 0.0
    %321 = vmatpush1.msra.mxu0 %v67
    %322 = vmatprep.subr.mxu0 0.0
    %323 = vmatpush1.msra.mxu0 %v68
    %324 = vmatprep.subr.mxu0 0.0
    %325 = vmatpush1.msra.mxu0 %v69
    %326 = vmatprep.subr.mxu0 0.0
    %327 = vmatpush1.msra.mxu0 %v70
    %328 = vmatprep.subr.mxu0 0.0
    %329 = vmatpush1.msra.mxu0 %v71
    %330 = vmatprep.subr.mxu0 0.0
    %331 = vmatpush1.msra.mxu0 %v72
    %332 = vmatprep.subr.mxu0 0.0
    %333 = vmatpush1.msra.mxu0 %v73
    %334 = vmatprep.subr.mxu0 0.0
    %335 = vmatpush1.msra.mxu0 %v74
    %336 = vmatprep.subr.mxu0 0.0
    %337 = vmatpush1.msra.mxu0 %v75
    %338 = vmatprep.subr.mxu0 0.0
    %339 = vmatpush1.msra.mxu0 %v76
    %340 = vmatprep.subr.mxu0 0.0
    %341 = vmatpush1.msra.mxu0 %v77
    %342 = vmatprep.subr.mxu0 0.0
    %343 = vmatpush1.msra.mxu0 %v78
    %344 = vmatprep.subr.mxu0 0.0
    %345 = vmatpush1.msra.mxu0 %v79
    %346 = vmatprep.subr.mxu0 0.0
    %347 = vmatpush1.msra.mxu0 %v80
    %348 = vmatprep.subr.mxu0 0.0
    %349 = vmatpush1.msra.mxu0 %v81
    %350 = vmatprep.subr.mxu0 0.0
    %351 = vmatpush1.msra.mxu0 %v82
    %352 = vmatprep.subr.mxu0 0.0
    %353 = vmatpush1.msra.mxu0 %v83
    %354 = vmatprep.subr.mxu0 0.0
    %355 = vmatpush1.msra.mxu0 %v84
    %356 = vmatprep.subr.mxu0 0.0
    %357 = vmatpush1.msra.mxu0 %v85
    %358 = vmatprep.subr.mxu0 0.0
    %359 = vmatpush1.msra.mxu0 %v86
    %360 = vmatprep.subr.mxu0 0.0
    %361 = vmatpush1.msra.mxu0 %v87
    %362 = vmatprep.mubr.f32.mxu0 %v194
    %363 = vmatmul.mubr.f32.gmra.mrb[0].mxu0 %v192
    %v364 = vpop.f32.mrb[0].mxu0
    %v365 = vadd.f32 %v295, %v364
    %v366 = vpop.f32.mrb[0].mxu0
    %367 = vdwg.mxu0
    %368 = vmatprep.subr.mxu0 0.0
    %369 = vmatpush1.msra.mxu0 %v88
    %370 = vmatprep.subr.mxu0 0.0
    %371 = vmatpush1.msra.mxu0 %v89
    %372 = vmatprep.subr.mxu0 0.0
    %373 = vmatpush1.msra.mxu0 %v90
    %374 = vmatprep.subr.mxu0 0.0
    %375 = vmatpush1.msra.mxu0 %v91
    %376 = vmatprep.subr.mxu0 0.0
    %377 = vmatpush1.msra.mxu0 %v92
    %378 = vmatprep.subr.mxu0 0.0
    %379 = vmatpush1.msra.mxu0 %v93
    %380 = vmatprep.subr.mxu0 0.0
    %381 = vmatpush1.msra.mxu0 %v94
    %382 = vmatprep.subr.mxu0 0.0
    %383 = vmatpush1.msra.mxu0 %v95
    %384 = vmatprep.subr.mxu0 0.0
    %385 = vmatpush1.msra.mxu0 %v96
    %386 = vmatprep.subr.mxu0 0.0
    %387 = vmatpush1.msra.mxu0 %v97
    %388 = vmatprep.subr.mxu0 0.0
    %389 = vmatpush1.msra.mxu0 %v98
    %390 = vmatprep.subr.mxu0 0.0
    %391 = vmatpush1.msra.mxu0 %v99
    %392 = vmatprep.subr.mxu0 0.0
    %393 = vmatpush1.msra.mxu0 %v100
    %394 = vmatprep.subr.mxu0 0.0
    %395 = vmatpush1.msra.mxu0 %v101
    %396 = vmatprep.subr.mxu0 0.0
    %397 = vmatpush1.msra.mxu0 %v102
    %398 = vmatprep.subr.mxu0 0.0
    %399 = vmatpush1.msra.mxu0 %v103
    %400 = vmatprep.subr.mxu0 0.0
    %401 = vmatpush1.msra.mxu0 %v104
    %402 = vmatprep.subr.mxu0 0.0
    %403 = vmatpush1.msra.mxu0 %v105
    %404 = vmatprep.subr.mxu0 0.0
    %405 = vmatpush1.msra.mxu0 %v106
    %406 = vmatprep.subr.mxu0 0.0
    %407 = vmatpush1.msra.mxu0 %v107
    %408 = vmatprep.subr.mxu0 0.0
    %409 = vmatpush1.msra.mxu0 %v108
    %410 = vmatprep.subr.mxu0 0.0
    %411 = vmatpush1.msra.mxu0 %v109
    %412 = vmatprep.subr.mxu0 0.0
    %413 = vmatpush1.msra.mxu0 %v110
    %414 = vmatprep.subr.mxu0 0.0
    %415 = vmatpush1.msra.mxu0 %v111
    %416 = vmatprep.subr.mxu0 0.0
    %417 = vmatpush1.msra.mxu0 %v112
    %418 = vmatprep.subr.mxu0 0.0
    %419 = vmatpush1.msra.mxu0 %v113
    %420 = vmatprep.subr.mxu0 0.0
    %421 = vmatpush1.msra.mxu0 %v114
    %422 = vmatprep.subr.mxu0 0.0
    %423 = vmatpush1.msra.mxu0 %v115
    %424 = vmatprep.subr.mxu0 0.0
    %425 = vmatpush1.msra.mxu0 %v116
    %426 = vmatprep.subr.mxu0 0.0
    %427 = vmatpush1.msra.mxu0 %v117
    %428 = vmatprep.subr.mxu0 0.0
    %429 = vmatpush1.msra.mxu0 %v118
    %430 = vmatprep.subr.mxu0 0.0
    %431 = vmatpush1.msra.mxu0 %v119
    %432 = vmatprep.mubr.f32.mxu0 %v210
    %433 = vmatmul.mubr.f32.gmra.mrb[0].mxu0 %v202
    %v434 = vpop.f32.mrb[0].mxu0
    %v435 = vadd.f32 %v365, %v434
    %v436 = vpop.f32.mrb[0].mxu0
    %437 = vdwg.mxu0
    %438 = vmatprep.subr.mxu0 0.0
    %439 = vmatpush1.msra.mxu0 %v120
    %440 = vmatprep.subr.mxu0 0.0
    %441 = vmatpush1.msra.mxu0 %v121
    %442 = vmatprep.subr.mxu0 0.0
    %443 = vmatpush1.msra.mxu0 %v122
    %444 = vmatprep.subr.mxu0 0.0
    %445 = vmatpush1.msra.mxu0 %v123
    %446 = vmatprep.subr.mxu0 0.0
    %447 = vmatpush1.msra.mxu0 %v124
    %448 = vmatprep.subr.mxu0 0.0
    %449 = vmatpush1.msra.mxu0 %v125
    %450 = vmatprep.subr.mxu0 0.0
    %451 = vmatpush1.msra.mxu0 %v126
    %452 = vmatprep.subr.mxu0 0.0
    %453 = vmatpush1.msra.mxu0 %v127
    %454 = vmatprep.subr.mxu0 0.0
    %455 = vmatpush1.msra.mxu0 %v128
    %456 = vmatprep.subr.mxu0 0.0
    %457 = vmatpush1.msra.mxu0 %v129
    %458 = vmatprep.subr.mxu0 0.0
    %459 = vmatpush1.msra.mxu0 %v130
    %460 = vmatprep.subr.mxu0 0.0
    %461 = vmatpush1.msra.mxu0 %v131
    %462 = vmatprep.subr.mxu0 0.0
    %463 = vmatpush1.msra.mxu0 %v132
    %464 = vmatprep.subr.mxu0 0.0
    %465 = vmatpush1.msra.mxu0 %v133
    %466 = vmatprep.subr.mxu0 0.0
    %467 = vmatpush1.msra.mxu0 %v134
    %468 = vmatprep.subr.mxu0 0.0
    %469 = vmatpush1.msra.mxu0 %v135
    %470 = vmatprep.subr.mxu0 0.0
    %471 = vmatpush1.msra.mxu0 %v136
    %472 = vmatprep.subr.mxu0 0.0
    %473 = vmatpush1.msra.mxu0 %v137
    %474 = vmatprep.subr.mxu0 0.0
    %475 = vmatpush1.msra.mxu0 %v138
    %476 = vmatprep.subr.mxu0 0.0
    %477 = vmatpush1.msra.mxu0 %v139
    %478 = vmatprep.subr.mxu0 0.0
    %479 = vmatpush1.msra.mxu0 %v140
    %480 = vmatprep.subr.mxu0 0.0
    %481 = vmatpush1.msra.mxu0 %v141
    %482 = vmatprep.subr.mxu0 0.0
    %483 = vmatpush1.msra.mxu0 %v142
    %484 = vmatprep.subr.mxu0 0.0
    %485 = vmatpush1.msra.mxu0 %v143
    %486 = vmatprep.subr.mxu0 0.0
    %487 = vmatpush1.msra.mxu0 %v144
    %488 = vmatprep.subr.mxu0 0.0
    %489 = vmatpush1.msra.mxu0 %v145
    %490 = vmatprep.subr.mxu0 0.0
    %491 = vmatpush1.msra.mxu0 %v146
    %492 = vmatprep.subr.mxu0 0.0
    %493 = vmatpush1.msra.mxu0 %v147
    %494 = vmatprep.subr.mxu0 0.0
    %495 = vmatpush1.msra.mxu0 %v148
    %496 = vmatprep.subr.mxu0 0.0
    %497 = vmatpush1.msra.mxu0 %v149
    %498 = vmatprep.subr.mxu0 0.0
    %499 = vmatpush1.msra.mxu0 %v150
    %500 = vmatprep.subr.mxu0 0.0
    %501 = vmatpush1.msra.mxu0 %v151
    %502 = vmatprep.mubr.f32.mxu0 %v211
    %503 = vmatmul.mubr.f32.gmra.mrb[0].mxu0 %v209
    %v504 = vpop.f32.mrb[0].mxu0
    %v505 = vadd.f32 %v435, %v504
    %v506 = vpop.f32.mrb[0].mxu0
    %507 = vdwg.mxu0
    %508 = vmatprep.subr.mxu0 0.0
    %509 = vmatpush1.msra.mxu0 %v152
    %510 = vmatprep.subr.mxu0 0.0
    %511 = vmatpush1.msra.mxu0 %v153
    %512 = vmatprep.subr.mxu0 0.0
    %513 = vmatpush1.msra.mxu0 %v154
    %514 = vmatprep.subr.mxu0 0.0
    %515 = vmatpush1.msra.mxu0 %v155
    %516 = vmatprep.subr.mxu0 0.0
    %517 = vmatpush1.msra.mxu0 %v156
    %518 = vmatprep.subr.mxu0 0.0
    %519 = vmatpush1.msra.mxu0 %v157
    %520 = vmatprep.subr.mxu0 0.0
    %521 = vmatpush1.msra.mxu0 %v158
    %522 = vmatprep.subr.mxu0 0.0
    %523 = vmatpush1.msra.mxu0 %v159
    %524 = vmatprep.subr.mxu0 0.0
    %525 = vmatpush1.msra.mxu0 %v160
    %526 = vmatprep.subr.mxu0 0.0
    %527 = vmatpush1.msra.mxu0 %v161
    %528 = vmatprep.subr.mxu0 0.0
    %529 = vmatpush1.msra.mxu0 %v162
    %530 = vmatprep.subr.mxu0 0.0
    %531 = vmatpush1.msra.mxu0 %v163
    %532 = vmatprep.subr.mxu0 0.0
    %533 = vmatpush1.msra.mxu0 %v164
    %534 = vmatprep.subr.mxu0 0.0
    %535 = vmatpush1.msra.mxu0 %v165
    %536 = vmatprep.subr.mxu0 0.0
    %537 = vmatpush1.msra.mxu0 %v166
    %538 = vmatprep.subr.mxu0 0.0
    %539 = vmatpush1.msra.mxu0 %v167
    %540 = vmatprep.subr.mxu0 0.0
    %541 = vmatpush1.msra.mxu0 0.0
    %542 = vmatprep.subr.mxu0 0.0
    %543 = vmatpush1.msra.mxu0 0.0
    %544 = vmatprep.subr.mxu0 0.0
    %545 = vmatpush1.msra.mxu0 0.0
    %546 = vmatprep.subr.mxu0 0.0
    %547 = vmatpush1.msra.mxu0 0.0
    %548 = vmatprep.subr.mxu0 0.0
    %549 = vmatpush1.msra.mxu0 0.0
    %550 = vmatprep.subr.mxu0 0.0
    %551 = vmatpush1.msra.mxu0 0.0
    %552 = vmatprep.subr.mxu0 0.0
    %553 = vmatpush1.msra.mxu0 0.0
    %554 = vmatprep.subr.mxu0 0.0
    %555 = vmatpush1.msra.mxu0 0.0
    %556 = vmatprep.subr.mxu0 0.0
    %557 = vmatpush1.msra.mxu0 0.0
    %558 = vmatprep.subr.mxu0 0.0
    %559 = vmatpush1.msra.mxu0 0.0
    %560 = vmatprep.subr.mxu0 0.0
    %561 = vmatpush1.msra.mxu0 0.0
    %562 = vmatprep.subr.mxu0 0.0
    %563 = vmatpush1.msra.mxu0 0.0
    %564 = vmatprep.subr.mxu0 0.0
    %565 = vmatpush1.msra.mxu0 0.0
    %566 = vmatprep.subr.mxu0 0.0
    %567 = vmatpush1.msra.mxu0 0.0
    %568 = vmatprep.subr.mxu0 0.0
    %569 = vmatpush1.msra.mxu0 0.0
    %570 = vmatprep.subr.mxu0 0.0
    %571 = vmatpush1.msra.mxu0 0.0
    %572 = vmatprep.mubr.f32.mxu0 0.0
    %573 = vmatmul.mubr.f32.gmra.mrb[0].mxu0 %v218
    %v574 = vpop.f32.mrb[0].mxu0
    %v575 = vadd.f32 %v505, %v574
    %v576 = vpop.f32.mrb[0].mxu0
    %577 = vdwg.mxu0
    %v578 = vld [vmem:[%s3] sm:$0xff]
    %v579 = vld [vmem:[%s3 + $0x8] sm:$0xff]
    %v580 = vld [vmem:[%s3 + $0x10] sm:$0xff]
    %v581 = vld [vmem:[%s3 + $0x18] sm:$0xff]
    %v582 = vld [vmem:[%s3 + $0x20] sm:$0xff]
    %v583 = vld [vmem:[%s3 + $0x28] sm:$0xff]
    %v584 = vld [vmem:[%s3 + $0x30] sm:$0xff]
    %v585 = vld [vmem:[%s3 + $0x38] sm:$0xff]
    %v586 = vld [vmem:[%s3 + $0x40] sm:$0xff]
    %v587 = vld [vmem:[%s3 + $0x48] sm:$0xff]
    %v588 = vld [vmem:[%s3 + $0x50] sm:$0xff]
    %v589 = vld [vmem:[%s3 + $0x58] sm:$0xff]
    %v590 = vld [vmem:[%s3 + $0x60] sm:$0xff]
    %v591 = vld [vmem:[%s3 + $0x68] sm:$0xff]
    %v592 = vld [vmem:[%s3 + $0x70] sm:$0xff]
    %v593 = vld [vmem:[%s3 + $0x78] sm:$0xff]
    %v594 = vld [vmem:[%s4] sm:$0x1]
    %v596 = vlaneseq
    %v597 = vshrl.u32 %v596, 7
    %v598 = vsub.s32 0, %v597
    %v599 = vrot.slane %v594, %v598
    %601 = vmatprep.subr.mxu0 0.0
    %602 = vmatpush1.msra.mxu0 %v578
    %603 = vmatprep.subr.mxu0 0.0
    %604 = vmatpush1.msra.mxu0 %v579
    %605 = vmatprep.subr.mxu0 0.0
    %606 = vmatpush1.msra.mxu0 %v580
    %607 = vmatprep.subr.mxu0 0.0
    %608 = vmatpush1.msra.mxu0 %v581
    %609 = vmatprep.subr.mxu0 0.0
    %610 = vmatpush1.msra.mxu0 %v582
    %611 = vmatprep.subr.mxu0 0.0
    %612 = vmatpush1.msra.mxu0 %v583
    %613 = vmatprep.subr.mxu0 0.0
    %614 = vmatpush1.msra.mxu0 %v584
    %615 = vmatprep.subr.mxu0 0.0
    %616 = vmatpush1.msra.mxu0 %v585
    %617 = vmatprep.subr.mxu0 0.0
    %618 = vmatpush1.msra.mxu0 %v586
    %619 = vmatprep.subr.mxu0 0.0
    %620 = vmatpush1.msra.mxu0 %v587
    %621 = vmatprep.subr.mxu0 0.0
    %622 = vmatpush1.msra.mxu0 %v588
    %623 = vmatprep.subr.mxu0 0.0
    %624 = vmatpush1.msra.mxu0 %v589
    %625 = vmatprep.subr.mxu0 0.0
    %626 = vmatpush1.msra.mxu0 %v590
    %627 = vmatprep.subr.mxu0 0.0
    %628 = vmatpush1.msra.mxu0 %v591
    %629 = vmatprep.subr.mxu0 0.0
    %630 = vmatpush1.msra.mxu0 %v592
    %631 = vmatprep.subr.mxu0 0.0
    %632 = vmatpush1.msra.mxu0 %v593
    %633 = vmatprep.subr.mxu0 0.0
    %634 = vmatpush1.msra.mxu0 0.0
    %635 = vmatprep.subr.mxu0 0.0
    %636 = vmatpush1.msra.mxu0 0.0
    %637 = vmatprep.subr.mxu0 0.0
    %638 = vmatpush1.msra.mxu0 0.0
    %639 = vmatprep.subr.mxu0 0.0
    %640 = vmatpush1.msra.mxu0 0.0
    %641 = vmatprep.subr.mxu0 0.0
    %642 = vmatpush1.msra.mxu0 0.0
    %643 = vmatprep.subr.mxu0 0.0
    %644 = vmatpush1.msra.mxu0 0.0
    %645 = vmatprep.subr.mxu0 0.0
    %646 = vmatpush1.msra.mxu0 0.0
    %647 = vmatprep.subr.mxu0 0.0
    %648 = vmatpush1.msra.mxu0 0.0
    %649 = vmatprep.subr.mxu0 0.0
    %650 = vmatpush1.msra.mxu0 0.0
    %651 = vmatprep.subr.mxu0 0.0
    %652 = vmatpush1.msra.mxu0 0.0
    %653 = vmatprep.subr.mxu0 0.0
    %654 = vmatpush1.msra.mxu0 0.0
    %655 = vmatprep.subr.mxu0 0.0
    %656 = vmatpush1.msra.mxu0 0.0
    %657 = vmatprep.subr.mxu0 0.0
    %658 = vmatpush1.msra.mxu0 0.0
    %659 = vmatprep.subr.mxu0 0.0
    %660 = vmatpush1.msra.mxu0 0.0
    %661 = vmatprep.subr.mxu0 0.0
    %662 = vmatpush1.msra.mxu0 0.0
    %663 = vmatprep.subr.mxu0 0.0
    %664 = vmatpush1.msra.mxu0 0.0
    %665 = vmatprep.mubr.f32.mxu0 0.0
    %666 = vmatmul.mubr.f32.gmra.mrb[0].mxu0 %v575
    %v667 = vpop.f32.mrb[0].mxu0
    %v668 = vadd.f32 %v599, %v667
    %v669 = vpop.f32.mrb[0].mxu0
    %670 = vdwg.mxu0
    %vm671 = vcmask 74752
    %v672 = vsel %vm671, %v668, -inf
    %673 = vmax.xlane.f32.xlu0 %v672
    %v674 = vpop.xlane.xlu0 %673
    %v675 = vsub.f32 %v668, %v674
    %v676 = vmul.f32 %v675, 1.442695
    %v677 = vpow.pop %v676
    %v678 = vsel %vm671, %v677, 0.0
    %679 = vadd.xlane.f32.xlu0 %v678
    %v680 = vpop.xlane.xlu0 %679
    %v681 = vrcp.pop %v680
    %v682 = vmul.f32 %v677, %v681
    %683 = vst.msk [vmem:[#allocation2] sm:$0x3] %vm671, %v682
    // Predicated region
    $region22: #{neural_net_forward.5} parent=1 // pred_check
      _
    $region23: #{neural_net_forward.5} parent=1 // pred_check_branch
      %685 = sbr.rel (0) target = $region25
    $region24: #{neural_net_forward.5} parent=1 // pred_region
      %s687 = ssub.s32 32, 32
      %688 = vsyncadd [#allocation3], %s687
      %s690 = sshll.u32 [#allocation2], 4
      %s691 = int_to_ptr.vmem [resolvable:$true] %s690
      %693 = dma.vmem_to_hbm [thread:$0]  %s691, 32, %s5, [#allocation3]
    $region25: #{neural_net_forward.5} parent=1 // pred_fallthru
      _
    // Predicated region
    $region26: #{neural_net_forward.5} parent=1 // pred_check
      _
    $region27: #{neural_net_forward.5} parent=1 // pred_check_branch
      %695 = sbr.rel (0) target = $region29
    $region28: #{neural_net_forward.5} parent=1 // pred_region
      %696 = dma.done [#allocation3], 32
    $region29: #{neural_net_forward.5} parent=1 // pred_fallthru
      _
    %697 = vsyncpa [#allocation3], 1

</llo_original>
